<compile_context>
chip_gen: v6e
topology: v6e:2x2x1
jax: 0.10.0
libtpu: 0.0.40
codegen_flags: <defaults>
</compile_context>

<pallas_src>
import jax
import jax.numpy as jnp
from jax.experimental import pallas as pl
from jax.experimental.pallas import tpu as pltpu


def _round_up(x, m):
    return (x + m - 1) // m * m


def _cdiv(a, b):
    return (a + b - 1) // b


def mlp_kernel(x_ref,
               w1_ref, b1_ref,
               w2_ref, b2_ref,
               w3_ref, b3_ref,
               w4_ref, b4_ref,
               o_ref):
    # Layer 1 + ReLU. x arrives f32; the bf16 cast is free VPU filler under the
    # MXU work. K=in_dim (<=128) is padded internally by the MXU at no cost.
    x = x_ref[...].astype(jnp.bfloat16)
    h = jnp.dot(x, w1_ref[...], preferred_element_type=jnp.float32)
    h = jnp.maximum(h + b1_ref[...], 0.0)
    # TODO(synk): nn.Dropout(0.5) is the identity at inference; training-mode
    # dropout (pltpu.prng_seed + prng_random_bits mask with 1/(1-p) scaling)
    # is intentionally not applied here.

    # Layer 2 + ReLU
    h = jnp.dot(h.astype(jnp.bfloat16), w2_ref[...],
                preferred_element_type=jnp.float32)
    h = jnp.maximum(h + b2_ref[...], 0.0)

    # Layer 3 + ReLU
    h = jnp.dot(h.astype(jnp.bfloat16), w3_ref[...],
                preferred_element_type=jnp.float32)
    h = jnp.maximum(h + b3_ref[...], 0.0)

    # Layer 4 (logits, no activation) — lane-dense 128-wide unmasked store.
    out = jnp.dot(h.astype(jnp.bfloat16), w4_ref[...],
                  preferred_element_type=jnp.float32)
    o_ref[...] = (out + b4_ref[...]).astype(o_ref.dtype)


def prepare_params(params):
    """One-time preprocessing: bf16 weight casts + lane-padding of the final
    layer to 128 output lanes. Do this once; reuse across forward calls."""
    w1, b1 = params["layer1"]
    w2, b2 = params["layer2"]
    w3, b3 = params["layer3"]
    w4, b4 = params["layer4"]
    in_dim = w1.shape[0]
    num_classes = w4.shape[1]
    N4 = _round_up(num_classes, 128)

    w4_p = jnp.zeros((w4.shape[0], N4), jnp.bfloat16)
    w4_p = w4_p.at[:, :num_classes].set(w4.astype(jnp.bfloat16))
    b4_p = jnp.zeros((1, N4), jnp.float32)
    b4_p = b4_p.at[:, :num_classes].set(b4.reshape(1, -1).astype(jnp.float32))

    return {
        "w1": w1.astype(jnp.bfloat16), "b1": b1.reshape(1, -1).astype(jnp.float32),
        "w2": w2.astype(jnp.bfloat16), "b2": b2.reshape(1, -1).astype(jnp.float32),
        "w3": w3.astype(jnp.bfloat16), "b3": b3.reshape(1, -1).astype(jnp.float32),
        "w4": w4_p, "b4": b4_p,
        "in_dim": in_dim, "num_classes": num_classes,
    }


def neural_net_forward(x, prepared, *, batch_tile=2048, min_steps=2):
    """x: [B, input_size] float32. prepared: output of prepare_params()."""
    B, in_dim = x.shape
    assert in_dim == prepared["in_dim"], "input feature dim mismatch"
    num_classes = prepared["num_classes"]
    N4 = prepared["b4"].shape[1]

    # Balanced batch tiling:
    #  * at least `min_steps` grid steps (v7x megacore sharding + pipeline overlap)
    #  * bt forced to a multiple of 16 (bf16 sublane packing / (8,128) tiling)
    #  * tiles balanced across B so padding waste stays < 16 rows per call.
    batch_tile = max(16, _round_up(batch_tile, 16))
    n_tiles = max(_cdiv(B, batch_tile), min_steps)
    bt = max(_round_up(_cdiv(B, n_tiles), 16), 16)
    grid_len = _cdiv(B, bt)
    B_pad = grid_len * bt

    x_p = x if B_pad == B else jnp.pad(x, ((0, B_pad - B), (0, 0)))

    w1, b1 = prepared["w1"], prepared["b1"]
    w2, b2 = prepared["w2"], prepared["b2"]
    w3, b3 = prepared["w3"], prepared["b3"]
    w4, b4 = prepared["w4"], prepared["b4"]

    # Weights/biases use constant block index 0 every grid step, so Pallas
    # DMAs them once; only the x tile and output tile stream per step.
    def replicated(arr):
        nd = arr.ndim
        return pl.BlockSpec(arr.shape, lambda i, _nd=nd: (0,) * _nd)

    out_pad = pl.pallas_call(
        mlp_kernel,
        out_shape=jax.ShapeDtypeStruct((B_pad, N4), jnp.float32),
        grid_spec=pltpu.PrefetchScalarGridSpec(
            num_scalar_prefetch=0,
            grid=(grid_len,),
            in_specs=[
                # x: last dim == full array dim (legal even when < 128).
                pl.BlockSpec((bt, in_dim), lambda i: (i, 0)),
                replicated(w1), replicated(b1),
                replicated(w2), replicated(b2),
                replicated(w3), replicated(b3),
                replicated(w4), replicated(b4),
            ],
            out_specs=pl.BlockSpec((bt, N4), lambda i: (i, 0)),
        ),
        compiler_params=pltpu.CompilerParams(
            dimension_semantics=("parallel",),
            vmem_limit_bytes=32 * 1024 * 1024),
    )(x_p, w1, b1, w2, b2, w3, b3, w4, b4)

    out = out_pad if B_pad == B else out_pad[:B]
    if N4 != num_classes:
        out = out[:, :num_classes]
    return out


def init_params(key, input_size, num_classes):
    """Deterministic synthetic init (PyTorch-Linear-like uniform fan-in scale).
    Weights stored as [F_in, F_out]; biases as [1, F_out]."""
    dims = [(input_size, 512), (512, 256), (256, 128), (128, num_classes)]
    names = ["layer1", "layer2", "layer3", "layer4"]
    params = {}
    for name, (fin, fout) in zip(names, dims):
        key, kw, kb = jax.random.split(key, 3)
        bound = 1.0 / jnp.sqrt(fin)
        w = jax.random.uniform(kw, (fin, fout), jnp.float32, -bound, bound)
        b = jax.random.uniform(kb, (1, fout), jnp.float32, -bound, bound)
        params[name] = (w, b)
    return params


def reference_forward(x, params):
    """Pure-JAX reference mirroring the kernel's bf16-in / f32-accumulate numerics."""
    h = x.astype(jnp.bfloat16)
    for name in ["layer1", "layer2", "layer3"]:
        w, b = params[name]
        h = jnp.maximum(
            jnp.dot(h, w.astype(jnp.bfloat16),
                    preferred_element_type=jnp.float32) + b, 0.0)
        h = h.astype(jnp.bfloat16)
    w, b = params["layer4"]
    return jnp.dot(h, w.astype(jnp.bfloat16),
                   preferred_element_type=jnp.float32) + b


if __name__ == "__main__":
    key = jax.random.PRNGKey(0)
    input_size = 32     # stand-in for X_train.shape[1]
    num_classes = 8     # stand-in for len(label_encoder.classes_)
    batch = 200         # not a multiple of the tile -> exercises batch padding

    kx, kp = jax.random.split(key)
    x = jax.random.normal(kx, (batch, input_size), jnp.float32)
    params = init_params(kp, input_size, num_classes)

    # One-time weight prep (bf16 casts + lane padding), reused across calls.
    prepared = prepare_params(params)

    # With min_steps=2 the grid has >=2 steps even at B=200 (bt=112, 2 tiles),
    # so both v7x TensorCores are engaged.
    out = neural_net_forward(x, prepared)
    out = jax.block_until_ready(out)

    ref = reference_forward(x, params)
    assert out.shape == (batch, num_classes)
    assert jnp.allclose(out, ref, atol=2e-2, rtol=2e-2), "mismatch vs reference"

    print("KERNEL_OK")
</pallas_src>

<mosaic_0001>
module attributes {stable_mosaic.version = 11 : i64} {
  func.func @mlp_kernel(%arg0: i32, %arg1: memref<112x32xf32, #tpu.memory_space<vmem>>, %arg2: memref<32x512xbf16, #tpu.memory_space<vmem>>, %arg3: memref<1x512xf32, #tpu.memory_space<vmem>>, %arg4: memref<512x256xbf16, #tpu.memory_space<vmem>>, %arg5: memref<1x256xf32, #tpu.memory_space<vmem>>, %arg6: memref<256x128xbf16, #tpu.memory_space<vmem>>, %arg7: memref<1x128xf32, #tpu.memory_space<vmem>>, %arg8: memref<128x128xbf16, #tpu.memory_space<vmem>>, %arg9: memref<1x128xf32, #tpu.memory_space<vmem>>, %arg10: memref<112x128xf32, #tpu.memory_space<vmem>>) attributes {dimension_semantics = [#tpu.dimension_semantics<parallel>], iteration_bounds = array<i64: 2>, scalar_prefetch = 0 : i64, scratch_operands = 0 : i64, tpu.core_type = #tpu.core_type<tc>, window_params = [{transform_indices = @transform_0, window_bounds = array<i64: 112, 32>}, {pipeline_mode = #tpu.pipeline_mode<synchronous>, transform_indices = @transform_1, window_bounds = array<i64: 32, 512>}, {pipeline_mode = #tpu.pipeline_mode<synchronous>, transform_indices = @transform_2, window_bounds = array<i64: 1, 512>}, {pipeline_mode = #tpu.pipeline_mode<synchronous>, transform_indices = @transform_3, window_bounds = array<i64: 512, 256>}, {pipeline_mode = #tpu.pipeline_mode<synchronous>, transform_indices = @transform_4, window_bounds = array<i64: 1, 256>}, {pipeline_mode = #tpu.pipeline_mode<synchronous>, transform_indices = @transform_5, window_bounds = array<i64: 256, 128>}, {pipeline_mode = #tpu.pipeline_mode<synchronous>, transform_indices = @transform_6, window_bounds = array<i64: 1, 128>}, {pipeline_mode = #tpu.pipeline_mode<synchronous>, transform_indices = @transform_7, window_bounds = array<i64: 128, 128>}, {pipeline_mode = #tpu.pipeline_mode<synchronous>, transform_indices = @transform_8, window_bounds = array<i64: 1, 128>}, {transform_indices = @transform_9, window_bounds = array<i64: 112, 128>}]} {
    %c0 = arith.constant 0 : index
    %c0_0 = arith.constant 0 : index
    %0 = vector.load %arg1[%c0, %c0_0] : memref<112x32xf32, #tpu.memory_space<vmem>>, vector<112x32xf32>
    %1 = arith.truncf %0 : vector<112x32xf32> to vector<112x32xbf16>
    %c0_1 = arith.constant 0 : index
    %c0_2 = arith.constant 0 : index
    %2 = vector.load %arg2[%c0_1, %c0_2] : memref<32x512xbf16, #tpu.memory_space<vmem>>, vector<32x512xbf16>
    %cst = arith.constant dense<0.000000e+00> : vector<112x512xf32>
    %3 = tpu.matmul %1, %2, %cst {dimension_numbers = #tpu.dot_dimension_numbers<[1], [0], [0], [1], [0, 0, 1, 1], [], []>} : vector<112x32xbf16>, vector<32x512xbf16>, vector<112x512xf32> -> vector<112x512xf32>
    %c0_3 = arith.constant 0 : index
    %c0_4 = arith.constant 0 : index
    %4 = vector.load %arg3[%c0_3, %c0_4] : memref<1x512xf32, #tpu.memory_space<vmem>>, vector<1x512xf32>
    %5 = vector.broadcast %4 : vector<1x512xf32> to vector<112x512xf32>
    %6 = arith.addf %3, %5 : vector<112x512xf32>
    %cst_5 = arith.constant 0.000000e+00 : f32
    %7 = vector.broadcast %cst_5 : f32 to vector<112x512xf32>
    %8 = arith.maximumf %6, %7 : vector<112x512xf32>
    %9 = arith.truncf %8 : vector<112x512xf32> to vector<112x512xbf16>
    %c0_6 = arith.constant 0 : index
    %c0_7 = arith.constant 0 : index
    %10 = vector.load %arg4[%c0_6, %c0_7] : memref<512x256xbf16, #tpu.memory_space<vmem>>, vector<512x256xbf16>
    %cst_8 = arith.constant dense<0.000000e+00> : vector<112x256xf32>
    %11 = tpu.matmul %9, %10, %cst_8 {dimension_numbers = #tpu.dot_dimension_numbers<[1], [0], [0], [1], [0, 0, 1, 1], [], []>} : vector<112x512xbf16>, vector<512x256xbf16>, vector<112x256xf32> -> vector<112x256xf32>
    %c0_9 = arith.constant 0 : index
    %c0_10 = arith.constant 0 : index
    %12 = vector.load %arg5[%c0_9, %c0_10] : memref<1x256xf32, #tpu.memory_space<vmem>>, vector<1x256xf32>
    %13 = vector.broadcast %12 : vector<1x256xf32> to vector<112x256xf32>
    %14 = arith.addf %11, %13 : vector<112x256xf32>
    %cst_11 = arith.constant 0.000000e+00 : f32
    %15 = vector.broadcast %cst_11 : f32 to vector<112x256xf32>
    %16 = arith.maximumf %14, %15 : vector<112x256xf32>
    %17 = arith.truncf %16 : vector<112x256xf32> to vector<112x256xbf16>
    %c0_12 = arith.constant 0 : index
    %c0_13 = arith.constant 0 : index
    %18 = vector.load %arg6[%c0_12, %c0_13] : memref<256x128xbf16, #tpu.memory_space<vmem>>, vector<256x128xbf16>
    %cst_14 = arith.constant dense<0.000000e+00> : vector<112x128xf32>
    %19 = tpu.matmul %17, %18, %cst_14 {dimension_numbers = #tpu.dot_dimension_numbers<[1], [0], [0], [1], [0, 0, 1, 1], [], []>} : vector<112x256xbf16>, vector<256x128xbf16>, vector<112x128xf32> -> vector<112x128xf32>
    %c0_15 = arith.constant 0 : index
    %c0_16 = arith.constant 0 : index
    %20 = vector.load %arg7[%c0_15, %c0_16] : memref<1x128xf32, #tpu.memory_space<vmem>>, vector<1x128xf32>
    %21 = vector.broadcast %20 : vector<1x128xf32> to vector<112x128xf32>
    %22 = arith.addf %19, %21 : vector<112x128xf32>
    %cst_17 = arith.constant 0.000000e+00 : f32
    %23 = vector.broadcast %cst_17 : f32 to vector<112x128xf32>
    %24 = arith.maximumf %22, %23 : vector<112x128xf32>
    %25 = arith.truncf %24 : vector<112x128xf32> to vector<112x128xbf16>
    %c0_18 = arith.constant 0 : index
    %c0_19 = arith.constant 0 : index
    %26 = vector.load %arg8[%c0_18, %c0_19] : memref<128x128xbf16, #tpu.memory_space<vmem>>, vector<128x128xbf16>
    %cst_20 = arith.constant dense<0.000000e+00> : vector<112x128xf32>
    %27 = tpu.matmul %25, %26, %cst_20 {dimension_numbers = #tpu.dot_dimension_numbers<[1], [0], [0], [1], [0, 0, 1, 1], [], []>} : vector<112x128xbf16>, vector<128x128xbf16>, vector<112x128xf32> -> vector<112x128xf32>
    %c0_21 = arith.constant 0 : index
    %c0_22 = arith.constant 0 : index
    %28 = vector.load %arg9[%c0_21, %c0_22] : memref<1x128xf32, #tpu.memory_space<vmem>>, vector<1x128xf32>
    %29 = vector.broadcast %28 : vector<1x128xf32> to vector<112x128xf32>
    %30 = arith.addf %27, %29 : vector<112x128xf32>
    %c0_23 = arith.constant 0 : index
    %c0_24 = arith.constant 0 : index
    %31 = vector.load %arg10[%c0_23, %c0_24] : memref<112x128xf32, #tpu.memory_space<vmem>>, vector<112x128xf32>
    tpu.vector_store %arg10[%c0_23, %c0_24], %30 {strides = array<i32>} : memref<112x128xf32, #tpu.memory_space<vmem>>, vector<112x128xf32>,
    return
  }
  func.func @transform_0(%arg0: i32) -> (i32, i32) {
    %c0_i32 = arith.constant 0 : i32
    %c0_i32_0 = arith.constant 0 : i32
    return %arg0, %c0_i32 : i32, i32
  }
  func.func @transform_1(%arg0: i32) -> (i32, i32) {
    %c0_i32 = arith.constant 0 : i32
    %c0_i32_0 = arith.constant 0 : i32
    %c0_i32_1 = arith.constant 0 : i32
    return %c0_i32, %c0_i32_0 : i32, i32
  }
  func.func @transform_2(%arg0: i32) -> (i32, i32) {
    %c0_i32 = arith.constant 0 : i32
    %c0_i32_0 = arith.constant 0 : i32
    %c0_i32_1 = arith.constant 0 : i32
    return %c0_i32, %c0_i32_0 : i32, i32
  }
  func.func @transform_3(%arg0: i32) -> (i32, i32) {
    %c0_i32 = arith.constant 0 : i32
    %c0_i32_0 = arith.constant 0 : i32
    %c0_i32_1 = arith.constant 0 : i32
    return %c0_i32, %c0_i32_0 : i32, i32
  }
  func.func @transform_4(%arg0: i32) -> (i32, i32) {
    %c0_i32 = arith.constant 0 : i32
    %c0_i32_0 = arith.constant 0 : i32
    %c0_i32_1 = arith.constant 0 : i32
    return %c0_i32, %c0_i32_0 : i32, i32
  }
  func.func @transform_5(%arg0: i32) -> (i32, i32) {
    %c0_i32 = arith.constant 0 : i32
    %c0_i32_0 = arith.constant 0 : i32
    %c0_i32_1 = arith.constant 0 : i32
    return %c0_i32, %c0_i32_0 : i32, i32
  }
  func.func @transform_6(%arg0: i32) -> (i32, i32) {
    %c0_i32 = arith.constant 0 : i32
    %c0_i32_0 = arith.constant 0 : i32
    %c0_i32_1 = arith.constant 0 : i32
    return %c0_i32, %c0_i32_0 : i32, i32
  }
  func.func @transform_7(%arg0: i32) -> (i32, i32) {
    %c0_i32 = arith.constant 0 : i32
    %c0_i32_0 = arith.constant 0 : i32
    %c0_i32_1 = arith.constant 0 : i32
    return %c0_i32, %c0_i32_0 : i32, i32
  }
  func.func @transform_8(%arg0: i32) -> (i32, i32) {
    %c0_i32 = arith.constant 0 : i32
    %c0_i32_0 = arith.constant 0 : i32
    %c0_i32_1 = arith.constant 0 : i32
    return %c0_i32, %c0_i32_0 : i32, i32
  }
  func.func @transform_9(%arg0: i32) -> (i32, i32) {
    %c0_i32 = arith.constant 0 : i32
    %c0_i32_0 = arith.constant 0 : i32
    return %arg0, %c0_i32 : i32, i32
  }
}

</mosaic_0001>

<llo_original>
// kernel: tpu_custom_call.1
$region0: #{tpu_custom_call.1}
  #allocation0 [shape = 'u32[]', space=smem, size = 0x4, offset = 0x4, fixed_abs, tag = 'smem constant byte address 0x4 - core index']
  #allocation1 [shape = 'u32[144,128]{1,0:T(1,128)}', space=vmem, size = 0x12000, scoped, tag = 'internal scratch']
  %s0 = inlined_call_operand.vmem [shape: f32[224,32], index: 0, kind: input, shape index: {}]
  %s1 = inlined_call_operand.vmem [shape: bf16[32,512], index: 1, kind: input, shape index: {}]
  %s2 = inlined_call_operand.vmem [shape: f32[1,512], index: 2, kind: input, shape index: {}]
  %s3 = inlined_call_operand.hbm [shape: bf16[512,256], index: 3, kind: input, shape index: {}]
  %s4 = inlined_call_operand.vmem [shape: f32[1,256], index: 4, kind: input, shape index: {}]
  %s5 = inlined_call_operand.vmem [shape: bf16[256,128], index: 5, kind: input, shape index: {}]
  %s6 = inlined_call_operand.vmem [shape: f32[1,128], index: 6, kind: input, shape index: {}]
  %s7 = inlined_call_operand.vmem [shape: bf16[128,128], index: 7, kind: input, shape index: {}]
  %s8 = inlined_call_operand.vmem [shape: f32[1,128], index: 8, kind: input, shape index: {}]
  %s9 = inlined_call_operand.hbm [shape: f32[224,128], index: 9, kind: output, shape index: {}]
  %s10 = sld [smem:[#allocation0]]
  $region73: #{tpu_custom_call.1} parent=0
    _
  %s12 = ssub.s32 1, %s10
  %s13 = scalar_select 0, %s12, %s10
  $region1: #{tpu_custom_call.1} parent=0
    #allocation2 [shape = 'u8[262144]{0}', space=vmem, size = 0x40000, scoped, tag = 'input window, operand 3, single buffered']
    #allocation3 [shape = 's32[2]{0}', space=sflag, size = 0x8, scoped, tag = 'scoped memory for tpu_custom_call.1']
    #allocation4 [shape = 's32[2]{0}', space=sflag, size = 0x8, scoped, tag = 'scoped memory for tpu_custom_call.1']
    #allocation5 [shape = 'u8[114688]{0}', space=vmem, size = 0x1c000, scoped, tag = 'output window, operand 0']
    %14 = vsyncpa [#allocation3], 0
    %15 = vsyncpa [#allocation4], 0
    %s16 = scalar_lea.sflag [#allocation4], 1
    %17 = vsyncpa %s16, 0
    loop: start=0, step=1, limit=4
    $region2: #{tpu_custom_call.1} parent=1 // loop_pre_header
      _
    $region3: #{tpu_custom_call.1} parent=1 // loop_header
      %s19 = sphi 0, %s23
      %p20 = scmp.ge.s32.totalorder %s19, 4
      %s29 = sphi 0, %s31
      %s32 = sphi 0, %s29
      %s33 = sphi 0, %s32
      %s49 = sphi 0, %s33
      %s53 = sphi 0, %s53
      %s55 = sphi 0, %s53
      %s56 = sphi 0, %s55
      %s70 = sphi 0, %s56
      %s74 = sphi 0, %s74
      %s76 = sphi 0, %s74
      %s77 = sphi 0, %s76
      %s91 = sphi 0, %s77
      %s95 = sphi 0, %s95
      %s97 = sphi 0, %s95
      %s98 = sphi 0, %s97
      %s112 = sphi 0, %s98
      %s116 = sphi 0, %s116
      %s118 = sphi 0, %s116
      %s119 = sphi 0, %s118
      %s133 = sphi 0, %s119
      %s137 = sphi 0, %s137
      %s139 = sphi 0, %s137
      %s140 = sphi 0, %s139
      %s154 = sphi 0, %s140
      %s158 = sphi 0, %s158
      %s160 = sphi 0, %s158
      %s161 = sphi 0, %s160
      %s175 = sphi 0, %s161
      %s179 = sphi 0, %s179
      %s181 = sphi 0, %s179
      %s182 = sphi 0, %s181
      %s196 = sphi 0, %s182
      %s200 = sphi 0, %s200
      %s202 = sphi 0, %s200
      %s203 = sphi 0, %s202
      %s217 = sphi 0, %s203
      %s223 = sphi 0, %s225
      %s226 = sphi 0, %s223
      %s227 = sphi 0, %s226
      %s243 = sphi 0, %s227
    $region4: #{tpu_custom_call.1} parent=1 // loop_header_branch
      %22 = sbr.rel (%p20) target = $region8
    $region5: #{tpu_custom_call.1} parent=1 // loop_body
      %s24 = ssub.s32 %s19, 1
      %s25 = ssub.s32 %s19, 2
      %s26 = sadd.s32 %s19, 1
      %s27 = ssub.s32 %s19, %s26
      %p28 = scmp.eq.s32.totalorder %s27, 0
      %s30 = sadd.s32 %s29, 1
      %s31 = scalar_select %p28, %s29, %s30
      %p34 = pneg %p28
      %p35 = scmp.eq.s32.totalorder %s19, 1
      %p36 = por %p34, %p35
      %p37 = scmp.ne.s32.totalorder %s29, %s32
      %p38 = scmp.eq.s32.totalorder %s19, 0
      %p39 = por %p37, %p38
      %p40 = scmp.ne.s32.totalorder %s29, %s32
      %p41 = scmp.eq.s32.totalorder %s24, 1
      %p42 = por %p40, %p41
      %p43 = scmp.ne.s32.totalorder %s32, %s33
      %p44 = scmp.eq.s32.totalorder %s24, 0
      %p45 = por %p43, %p44
      %p46 = scmp.ne.s32.totalorder %s32, %s33
      %p47 = scmp.eq.s32.totalorder %s25, 1
      %p48 = por %p46, %p47
      %p50 = scmp.ne.s32.totalorder %s33, %s49
      %p51 = scmp.eq.s32.totalorder %s25, 0
      %p52 = por %p50, %p51
      %s54 = sadd.s32 %s53, 1
      %p57 = scmp.eq.s32.totalorder %s19, 1
      %p58 = scmp.ne.s32.totalorder %s53, %s55
      %p59 = scmp.eq.s32.totalorder %s19, 0
      %p60 = por %p58, %p59
      %p61 = scmp.ne.s32.totalorder %s53, %s55
      %p62 = scmp.eq.s32.totalorder %s24, 1
      %p63 = por %p61, %p62
      %p64 = scmp.ne.s32.totalorder %s55, %s56
      %p65 = scmp.eq.s32.totalorder %s24, 0
      %p66 = por %p64, %p65
      %p67 = scmp.ne.s32.totalorder %s55, %s56
      %p68 = scmp.eq.s32.totalorder %s25, 1
      %p69 = por %p67, %p68
      %p71 = scmp.ne.s32.totalorder %s56, %s70
      %p72 = scmp.eq.s32.totalorder %s25, 0
      %p73 = por %p71, %p72
      %s75 = sadd.s32 %s74, 1
      %p78 = scmp.eq.s32.totalorder %s19, 1
      %p79 = scmp.ne.s32.totalorder %s74, %s76
      %p80 = scmp.eq.s32.totalorder %s19, 0
      %p81 = por %p79, %p80
      %p82 = scmp.ne.s32.totalorder %s74, %s76
      %p83 = scmp.eq.s32.totalorder %s24, 1
      %p84 = por %p82, %p83
      %p85 = scmp.ne.s32.totalorder %s76, %s77
      %p86 = scmp.eq.s32.totalorder %s24, 0
      %p87 = por %p85, %p86
      %p88 = scmp.ne.s32.totalorder %s76, %s77
      %p89 = scmp.eq.s32.totalorder %s25, 1
      %p90 = por %p88, %p89
      %p92 = scmp.ne.s32.totalorder %s77, %s91
      %p93 = scmp.eq.s32.totalorder %s25, 0
      %p94 = por %p92, %p93
      %s96 = sadd.s32 %s95, 1
      %p99 = scmp.eq.s32.totalorder %s19, 1
      %p100 = scmp.ne.s32.totalorder %s95, %s97
      %p101 = scmp.eq.s32.totalorder %s19, 0
      %p102 = por %p100, %p101
      %p103 = scmp.ne.s32.totalorder %s95, %s97
      %p104 = scmp.eq.s32.totalorder %s24, 1
      %p105 = por %p103, %p104
      %p106 = scmp.ne.s32.totalorder %s97, %s98
      %p107 = scmp.eq.s32.totalorder %s24, 0
      %p108 = por %p106, %p107
      %p109 = scmp.ne.s32.totalorder %s97, %s98
      %p110 = scmp.eq.s32.totalorder %s25, 1
      %p111 = por %p109, %p110
      %p113 = scmp.ne.s32.totalorder %s98, %s112
      %p114 = scmp.eq.s32.totalorder %s25, 0
      %p115 = por %p113, %p114
      %s117 = sadd.s32 %s116, 1
      %p120 = scmp.eq.s32.totalorder %s19, 1
      %p121 = scmp.ne.s32.totalorder %s116, %s118
      %p122 = scmp.eq.s32.totalorder %s19, 0
      %p123 = por %p121, %p122
      %p124 = scmp.ne.s32.totalorder %s116, %s118
      %p125 = scmp.eq.s32.totalorder %s24, 1
      %p126 = por %p124, %p125
      %p127 = scmp.ne.s32.totalorder %s118, %s119
      %p128 = scmp.eq.s32.totalorder %s24, 0
      %p129 = por %p127, %p128
      %p130 = scmp.ne.s32.totalorder %s118, %s119
      %p131 = scmp.eq.s32.totalorder %s25, 1
      %p132 = por %p130, %p131
      %p134 = scmp.ne.s32.totalorder %s119, %s133
      %p135 = scmp.eq.s32.totalorder %s25, 0
      %p136 = por %p134, %p135
      %s138 = sadd.s32 %s137, 1
      %p141 = scmp.eq.s32.totalorder %s19, 1
      %p142 = scmp.ne.s32.totalorder %s137, %s139
      %p143 = scmp.eq.s32.totalorder %s19, 0
      %p144 = por %p142, %p143
      %p145 = scmp.ne.s32.totalorder %s137, %s139
      %p146 = scmp.eq.s32.totalorder %s24, 1
      %p147 = por %p145, %p146
      %p148 = scmp.ne.s32.totalorder %s139, %s140
      %p149 = scmp.eq.s32.totalorder %s24, 0
      %p150 = por %p148, %p149
      %p151 = scmp.ne.s32.totalorder %s139, %s140
      %p152 = scmp.eq.s32.totalorder %s25, 1
      %p153 = por %p151, %p152
      %p155 = scmp.ne.s32.totalorder %s140, %s154
      %p156 = scmp.eq.s32.totalorder %s25, 0
      %p157 = por %p155, %p156
      %s159 = sadd.s32 %s158, 1
      %p162 = scmp.eq.s32.totalorder %s19, 1
      %p163 = scmp.ne.s32.totalorder %s158, %s160
      %p164 = scmp.eq.s32.totalorder %s19, 0
      %p165 = por %p163, %p164
      %p166 = scmp.ne.s32.totalorder %s158, %s160
      %p167 = scmp.eq.s32.totalorder %s24, 1
      %p168 = por %p166, %p167
      %p169 = scmp.ne.s32.totalorder %s160, %s161
      %p170 = scmp.eq.s32.totalorder %s24, 0
      %p171 = por %p169, %p170
      %p172 = scmp.ne.s32.totalorder %s160, %s161
      %p173 = scmp.eq.s32.totalorder %s25, 1
      %p174 = por %p172, %p173
      %p176 = scmp.ne.s32.totalorder %s161, %s175
      %p177 = scmp.eq.s32.totalorder %s25, 0
      %p178 = por %p176, %p177
      %s180 = sadd.s32 %s179, 1
      %p183 = scmp.eq.s32.totalorder %s19, 1
      %p184 = scmp.ne.s32.totalorder %s179, %s181
      %p185 = scmp.eq.s32.totalorder %s19, 0
      %p186 = por %p184, %p185
      %p187 = scmp.ne.s32.totalorder %s179, %s181
      %p188 = scmp.eq.s32.totalorder %s24, 1
      %p189 = por %p187, %p188
      %p190 = scmp.ne.s32.totalorder %s181, %s182
      %p191 = scmp.eq.s32.totalorder %s24, 0
      %p192 = por %p190, %p191
      %p193 = scmp.ne.s32.totalorder %s181, %s182
      %p194 = scmp.eq.s32.totalorder %s25, 1
      %p195 = por %p193, %p194
      %p197 = scmp.ne.s32.totalorder %s182, %s196
      %p198 = scmp.eq.s32.totalorder %s25, 0
      %p199 = por %p197, %p198
      %s201 = sadd.s32 %s200, 1
      %p204 = scmp.eq.s32.totalorder %s19, 1
      %p205 = scmp.ne.s32.totalorder %s200, %s202
      %p206 = scmp.eq.s32.totalorder %s19, 0
      %p207 = por %p205, %p206
      %p208 = scmp.ne.s32.totalorder %s200, %s202
      %p209 = scmp.eq.s32.totalorder %s24, 1
      %p210 = por %p208, %p209
      %p211 = scmp.ne.s32.totalorder %s202, %s203
      %p212 = scmp.eq.s32.totalorder %s24, 0
      %p213 = por %p211, %p212
      %p214 = scmp.ne.s32.totalorder %s202, %s203
      %p215 = scmp.eq.s32.totalorder %s25, 1
      %p216 = por %p214, %p215
      %p218 = scmp.ne.s32.totalorder %s203, %s217
      %p219 = scmp.eq.s32.totalorder %s25, 0
      %p220 = por %p218, %p219
      %s221 = ssub.s32 %s19, %s26
      %p222 = scmp.eq.s32.totalorder %s221, 0
      %s224 = sadd.s32 %s223, 1
      %s225 = scalar_select %p222, %s223, %s224
      %p228 = pneg %p222
      %p229 = scmp.eq.s32.totalorder %s19, 1
      %p230 = por %p228, %p229
      %p231 = scmp.ne.s32.totalorder %s223, %s226
      %p232 = scmp.eq.s32.totalorder %s19, 0
      %p233 = por %p231, %p232
      %p234 = scmp.ne.s32.totalorder %s223, %s226
      %p235 = scmp.eq.s32.totalorder %s24, 1
      %p236 = por %p234, %p235
      %p237 = scmp.ne.s32.totalorder %s226, %s227
      %p238 = scmp.eq.s32.totalorder %s24, 0
      %p239 = por %p237, %p238
      %p240 = scmp.ne.s32.totalorder %s226, %s227
      %p241 = scmp.eq.s32.totalorder %s25, 1
      %p242 = por %p240, %p241
      %p244 = scmp.ne.s32.totalorder %s227, %s243
      %p245 = scmp.eq.s32.totalorder %s25, 0
      %p246 = por %p244, %p245
      %p247 = scmp.le.s32.totalorder 1, %s19
      %p248 = scmp.lt.s32.totalorder %s19, 3
      %p249 = pnand %p247, %p248
      %p250 = pneg %p249
      // Predicated region
      $region9: #{tpu_custom_call.1} parent=5 // pred_check
        _
      $region10: #{tpu_custom_call.1} parent=5 // pred_check_branch
        %252 = sbr.rel (%p249) target = $region12
      $region11: #{tpu_custom_call.1} parent=5 // pred_region
        %s253 = ssub.s32 %s19, 1
        // Predicated region
        $region13: #{tpu_custom_call.1} parent=11 // pred_check
          %p254 = pneg %p66
        $region14: #{tpu_custom_call.1} parent=11 // pred_check_branch
          %256 = sbr.rel (%p254) target = $region16
        $region15: #{tpu_custom_call.1} parent=11 // pred_region
          _
        $region16: #{tpu_custom_call.1} parent=11 // pred_fallthru
          _
        // Predicated region
        $region17: #{tpu_custom_call.1} parent=11 // pred_check
          %p257 = pneg %p87
        $region18: #{tpu_custom_call.1} parent=11 // pred_check_branch
          %259 = sbr.rel (%p257) target = $region20
        $region19: #{tpu_custom_call.1} parent=11 // pred_region
          _
        $region20: #{tpu_custom_call.1} parent=11 // pred_fallthru
          _
        // Predicated region
        $region21: #{tpu_custom_call.1} parent=11 // pred_check
          %p260 = pneg %p108
        $region22: #{tpu_custom_call.1} parent=11 // pred_check_branch
          %262 = sbr.rel (%p260) target = $region24
        $region23: #{tpu_custom_call.1} parent=11 // pred_region
          %s264 = ssub.s32 8192, 8192
          %265 = vsyncadd [#allocation3], %s264
          %s266 = sshll.u32 [#allocation2], 4
          %s267 = int_to_ptr.vmem [resolvable:$true] %s266
          %272 = dma.hbm_to_vmem [thread:$0]  %s3, 8192, %s267, [#allocation3], 128, 128, 8
        $region24: #{tpu_custom_call.1} parent=11 // pred_fallthru
          _
        // Predicated region
        $region25: #{tpu_custom_call.1} parent=11 // pred_check
          %p273 = pneg %p129
        $region26: #{tpu_custom_call.1} parent=11 // pred_check_branch
          %275 = sbr.rel (%p273) target = $region28
        $region27: #{tpu_custom_call.1} parent=11 // pred_region
          _
        $region28: #{tpu_custom_call.1} parent=11 // pred_fallthru
          _
        // Predicated region
        $region29: #{tpu_custom_call.1} parent=11 // pred_check
          %p276 = pneg %p150
        $region30: #{tpu_custom_call.1} parent=11 // pred_check_branch
          %278 = sbr.rel (%p276) target = $region32
        $region31: #{tpu_custom_call.1} parent=11 // pred_region
          _
        $region32: #{tpu_custom_call.1} parent=11 // pred_fallthru
          _
        // Predicated region
        $region33: #{tpu_custom_call.1} parent=11 // pred_check
          %p279 = pneg %p171
        $region34: #{tpu_custom_call.1} parent=11 // pred_check_branch
          %281 = sbr.rel (%p279) target = $region36
        $region35: #{tpu_custom_call.1} parent=11 // pred_region
          _
        $region36: #{tpu_custom_call.1} parent=11 // pred_fallthru
          _
        // Predicated region
        $region37: #{tpu_custom_call.1} parent=11 // pred_check
          %p282 = pneg %p192
        $region38: #{tpu_custom_call.1} parent=11 // pred_check_branch
          %284 = sbr.rel (%p282) target = $region40
        $region39: #{tpu_custom_call.1} parent=11 // pred_region
          _
        $region40: #{tpu_custom_call.1} parent=11 // pred_fallthru
          _
        // Predicated region
        $region41: #{tpu_custom_call.1} parent=11 // pred_check
          %p285 = pneg %p213
        $region42: #{tpu_custom_call.1} parent=11 // pred_check_branch
          %287 = sbr.rel (%p285) target = $region44
        $region43: #{tpu_custom_call.1} parent=11 // pred_region
          _
        $region44: #{tpu_custom_call.1} parent=11 // pred_fallthru
          _
      $region12: #{tpu_custom_call.1} parent=5 // pred_fallthru
        _
      %p288 = scmp.lt.s32.totalorder %s19, 2
      // Predicated region
      $region45: #{tpu_custom_call.1} parent=5 // pred_check
        %p289 = pneg %p288
      $region46: #{tpu_custom_call.1} parent=5 // pred_check_branch
        %291 = sbr.rel (%p289) target = $region48
      $region47: #{tpu_custom_call.1} parent=5 // pred_region
        // Predicated region
        $region49: #{tpu_custom_call.1} parent=47 // pred_check
          %p292 = pneg %p39
        $region50: #{tpu_custom_call.1} parent=47 // pred_check_branch
          %294 = sbr.rel (%p292) target = $region52
        $region51: #{tpu_custom_call.1} parent=47 // pred_region
          %s295 = smul.u32 14, %s19
          %p296 = scmp.lt.s32.totalorder %s295, 27
          %s297 = scalar_select %p296, %s295, 27
          %s298 = smul.addr %s297, 8
          %s299 = scalar_lea.vmem %s0, %s298
          %s300 = smul.u32 14, %s19
        $region52: #{tpu_custom_call.1} parent=47 // pred_fallthru
          _
      $region48: #{tpu_custom_call.1} parent=5 // pred_fallthru
        _
      %p301 = scmp.le.s32.totalorder 1, %s19
      %p302 = scmp.lt.s32.totalorder %s19, 3
      %p303 = pnand %p301, %p302
      %p304 = pneg %p303
      // Predicated region
      $region53: #{tpu_custom_call.1} parent=5 // pred_check
        _
      $region54: #{tpu_custom_call.1} parent=5 // pred_check_branch
        %306 = sbr.rel (%p303) target = $region56
      $region55: #{tpu_custom_call.1} parent=5 // pred_region
        %s307 = ssub.s32 %s19, 1
        // Predicated region
        $region57: #{tpu_custom_call.1} parent=55 // pred_check
          %p308 = pneg %p108
        $region58: #{tpu_custom_call.1} parent=55 // pred_check_branch
          %310 = sbr.rel (%p308) target = $region60
        $region59: #{tpu_custom_call.1} parent=55 // pred_region
          %311 = dma.done [#allocation3], 8192
        $region60: #{tpu_custom_call.1} parent=55 // pred_fallthru
          _
        %s312 = smul.u32 14, %s24
        %p313 = scmp.lt.s32.totalorder %s312, 27
        %s314 = scalar_select %p313, %s312, 27
        %s315 = smul.addr %s314, 8
        %s316 = scalar_lea.vmem %s0, %s315
        %p317 = pneg %p45
        %p318 = pneg %p42
        %p319 = pneg %p66
        %p320 = pneg %p63
        %p321 = pneg %p87
        %p322 = pneg %p84
        %p323 = pneg %p108
        %p324 = pneg %p105
        %p325 = pneg %p129
        %p326 = pneg %p126
        %p327 = pneg %p150
        %p328 = pneg %p147
        %p329 = pneg %p171
        %p330 = pneg %p168
        %p331 = pneg %p192
        %p332 = pneg %p189
        %p333 = pneg %p213
        %p334 = pneg %p210
        %p335 = pneg %p239
        %p336 = pneg %p236
        %s337 = sand.u32 %s226, 1
        %s338 = scalar_lea.sflag [#allocation4], %s337
        %s339 = sand.u32 %s226, 1
        %s340 = smul.addr %s339, 112
        %s341 = scalar_lea.vmem [#allocation5], %s340
        %s342 = smul.u32 14, %s24
        %p343 = scmp.lt.s32.totalorder %s342, 27
        %s344 = scalar_select %p343, %s342, 27
        %s345 = smul.addr %s344, 8
        %s346 = scalar_lea.vmem %s0, %s345
        %s347 = smul.u32 14, %s24
        %s348 = smul.u32 14, %s24
        %v350 = vld [vmem:[%s346] sm:$0xff]
        %v351 = vld [vmem:[%s346 + $0x8] sm:$0xff]
        %v352 = vld [vmem:[%s346 + $0x10] sm:$0xff]
        %v353 = vld [vmem:[%s346 + $0x18] sm:$0xff]
        %v354 = vld [vmem:[%s346 + $0x20] sm:$0xff]
        %v355 = vld [vmem:[%s346 + $0x28] sm:$0xff]
        %v356 = vld [vmem:[%s346 + $0x30] sm:$0xff]
        %v357 = vld [vmem:[%s346 + $0x38] sm:$0xff]
        %v358 = vld [vmem:[%s346 + $0x40] sm:$0xff]
        %v359 = vld [vmem:[%s346 + $0x48] sm:$0xff]
        %v360 = vld [vmem:[%s346 + $0x50] sm:$0xff]
        %v361 = vld [vmem:[%s346 + $0x58] sm:$0xff]
        %v362 = vld [vmem:[%s346 + $0x60] sm:$0xff]
        %v363 = vld [vmem:[%s346 + $0x68] sm:$0xff]
        %v364 = vpack.c.bf16 %v351, %v350
        %v365 = vpack.c.bf16 %v353, %v352
        %v366 = vpack.c.bf16 %v355, %v354
        %v367 = vpack.c.bf16 %v357, %v356
        %v368 = vpack.c.bf16 %v359, %v358
        %v369 = vpack.c.bf16 %v361, %v360
        %v370 = vpack.c.bf16 %v363, %v362
        %v371 = vld [vmem:[%s1] sm:$0xff]
        %v372 = vld [vmem:[%s1 + $0x8] sm:$0xff]
        %v373 = vld [vmem:[%s1 + $0x10] sm:$0xff]
        %v374 = vld [vmem:[%s1 + $0x18] sm:$0xff]
        %v375 = vld [vmem:[%s1 + $0x20] sm:$0xff]
        %v376 = vld [vmem:[%s1 + $0x28] sm:$0xff]
        %v377 = vld [vmem:[%s1 + $0x30] sm:$0xff]
        %v378 = vld [vmem:[%s1 + $0x38] sm:$0xff]
        %v379 = vld [vmem:[%s2] sm:$0xf]
        %v381 = vlaneseq
        %v382 = vshrl.u32 %v381, 7
        %v383 = vsub.s32 0, %v382
        %v384 = vrot.slane %v379, %v383
        %v385 = vlaneseq
        %v386 = vshrl.u32 %v385, 7
        %v387 = vsub.s32 1, %v386
        %v388 = vrot.slane %v379, %v387
        %v389 = vlaneseq
        %v390 = vshrl.u32 %v389, 7
        %v391 = vsub.s32 2, %v390
        %v392 = vrot.slane %v379, %v391
        %v393 = vlaneseq
        %v394 = vshrl.u32 %v393, 7
        %v395 = vsub.s32 3, %v394
        %v396 = vrot.slane %v379, %v395
        %v409 = vunpack.c.l.b16 %v371
        %v410 = vunpack.c.h.b16 %v371
        %v411 = vunpack.c.l.b16 %v372
        %v412 = vunpack.c.h.b16 %v372
        %v413 = vunpack.c.l.b16 %v373
        %v414 = vunpack.c.h.b16 %v373
        %v415 = vunpack.c.l.b16 %v374
        %v416 = vunpack.c.h.b16 %v374
        %v417 = vunpack.c.l.b16 %v375
        %v418 = vunpack.c.h.b16 %v375
        %v419 = vunpack.c.l.b16 %v376
        %v420 = vunpack.c.h.b16 %v376
        %v421 = vunpack.c.l.b16 %v377
        %v422 = vunpack.c.h.b16 %v377
        %v423 = vunpack.c.l.b16 %v378
        %v424 = vunpack.c.h.b16 %v378
        %v425 = vpack.c.b16 %v413, %v409
        %v426 = vpack.c.b16 %v414, %v410
        %v427 = vpack.c.b16 %v415, %v411
        %v428 = vpack.c.b16 %v416, %v412
        %v429 = vpack.c.b16 %v421, %v417
        %v430 = vpack.c.b16 %v422, %v418
        %v431 = vpack.c.b16 %v423, %v419
        %v432 = vpack.c.b16 %v424, %v420
        %vm441 = vcmask 261120
        %v443 = vsel %vm441, %v364, 0
        %v446 = vsel %vm441, %v365, 0
        %v449 = vsel %vm441, %v366, 0
        %v452 = vsel %vm441, %v367, 0
        %v455 = vsel %vm441, %v368, 0
        %v458 = vsel %vm441, %v369, 0
        %v461 = vsel %vm441, %v370, 0
        %463 = vmatprep.subr.bf16.mxu0 0
        %464 = vmatpush1.bf16.msra.mxu0 0
        %465 = vmatprep.subr.bf16.mxu0 0
        %466 = vmatpush1.bf16.msra.mxu0 0
        %467 = vmatprep.subr.bf16.mxu0 0
        %468 = vmatpush1.bf16.msra.mxu0 0
        %469 = vmatprep.subr.bf16.mxu0 0
        %470 = vmatpush1.bf16.msra.mxu0 0
        %471 = vmatprep.subr.bf16.mxu0 0
        %472 = vmatpush1.bf16.msra.mxu0 0
        %473 = vmatprep.subr.bf16.mxu0 0
        %474 = vmatpush1.bf16.msra.mxu0 0
        %475 = vmatprep.subr.bf16.mxu0 %v430
        %476 = vmatpush1.bf16.msra.mxu0 %v429
        %477 = vmatprep.subr.bf16.mxu0 %v426
        %478 = vmatpush1.bf16.msra.mxu0 %v425
        %479 = vmatprep.subr.bf16.mxu0 0
        %480 = vmatpush2.bf16.msra.mxu0 0
        %481 = vmatprep.subr.bf16.mxu0 0
        %482 = vmatpush2.bf16.msra.mxu0 0
        %483 = vmatprep.subr.bf16.mxu0 0
        %484 = vmatpush2.bf16.msra.mxu0 0
        %485 = vmatprep.subr.bf16.mxu0 0
        %486 = vmatpush2.bf16.msra.mxu0 0
        %487 = vmatprep.subr.bf16.mxu0 0
        %488 = vmatpush2.bf16.msra.mxu0 0
        %489 = vmatprep.subr.bf16.mxu0 0
        %490 = vmatpush2.bf16.msra.mxu0 0
        %491 = vmatprep.subr.bf16.mxu0 0
        %492 = vmatpush2.bf16.msra.mxu0 0
        %493 = vmatprep.subr.bf16.mxu0 0
        %494 = vmatpush2.bf16.msra.mxu0 0
        %495 = vmatprep.mubr.bf16.mxu0 0
        %496 = vmatmul.mubr.bf16.gmra.mxu0 %v443
        %v497 = vpop.f32.mrf.mxu0
        %v498 = vadd.f32 %v384, %v497
        %v499 = vpop.f32.mrf.mxu0
        %v500 = vadd.f32 %v388, %v499
        %v501 = vpop.f32.mrf.mxu0
        %v502 = vadd.f32 %v384, %v501
        %v503 = vpop.f32.mrf.mxu0
        %v504 = vadd.f32 %v388, %v503
        %505 = vmatprep.mubr.bf16.mxu0 0
        %506 = vmatmul.mubr.bf16.gmra.mxu0 %v446
        %v507 = vpop.f32.mrf.mxu0
        %v508 = vadd.f32 %v384, %v507
        %v509 = vpop.f32.mrf.mxu0
        %v510 = vadd.f32 %v388, %v509
        %v511 = vpop.f32.mrf.mxu0
        %v512 = vadd.f32 %v384, %v511
        %v513 = vpop.f32.mrf.mxu0
        %v514 = vadd.f32 %v388, %v513
        %515 = vmatprep.mubr.bf16.mxu0 0
        %516 = vmatmul.mubr.bf16.gmra.mxu0 %v449
        %v517 = vpop.f32.mrf.mxu0
        %v518 = vadd.f32 %v384, %v517
        %v519 = vpop.f32.mrf.mxu0
        %v520 = vadd.f32 %v388, %v519
        %v521 = vpop.f32.mrf.mxu0
        %v522 = vadd.f32 %v384, %v521
        %v523 = vpop.f32.mrf.mxu0
        %v524 = vadd.f32 %v388, %v523
        %525 = vmatprep.mubr.bf16.mxu0 0
        %526 = vmatmul.mubr.bf16.gmra.mxu0 %v452
        %v527 = vpop.f32.mrf.mxu0
        %v528 = vadd.f32 %v384, %v527
        %v529 = vpop.f32.mrf.mxu0
        %v530 = vadd.f32 %v388, %v529
        %v531 = vpop.f32.mrf.mxu0
        %v532 = vadd.f32 %v384, %v531
        %v533 = vpop.f32.mrf.mxu0
        %v534 = vadd.f32 %v388, %v533
        %535 = vmatprep.mubr.bf16.mxu0 0
        %536 = vmatmul.mubr.bf16.gmra.mxu0 %v455
        %v537 = vpop.f32.mrf.mxu0
        %v538 = vadd.f32 %v384, %v537
        %v539 = vpop.f32.mrf.mxu0
        %v540 = vadd.f32 %v388, %v539
        %v541 = vpop.f32.mrf.mxu0
        %v542 = vadd.f32 %v384, %v541
        %v543 = vpop.f32.mrf.mxu0
        %v544 = vadd.f32 %v388, %v543
        %545 = vmatprep.mubr.bf16.mxu0 0
        %546 = vmatmul.mubr.bf16.gmra.mxu0 %v458
        %v547 = vpop.f32.mrf.mxu0
        %v548 = vadd.f32 %v384, %v547
        %v549 = vpop.f32.mrf.mxu0
        %v550 = vadd.f32 %v388, %v549
        %v551 = vpop.f32.mrf.mxu0
        %v552 = vadd.f32 %v384, %v551
        %v553 = vpop.f32.mrf.mxu0
        %v554 = vadd.f32 %v388, %v553
        %555 = vmatprep.mubr.bf16.mxu0 0
        %556 = vmatmul.mubr.bf16.gmra.mxu0 %v461
        %v557 = vpop.f32.mrf.mxu0
        %v558 = vadd.f32 %v384, %v557
        %v559 = vpop.f32.mrf.mxu0
        %v560 = vadd.f32 %v388, %v559
        %v561 = vpop.f32.mrf.mxu0
        %v562 = vadd.f32 %v384, %v561
        %v563 = vpop.f32.mrf.mxu0
        %v564 = vadd.f32 %v388, %v563
        %565 = vdwg.mxu0
        %566 = vmatprep.subr.bf16.mxu0 0
        %567 = vmatpush1.bf16.msra.mxu0 0
        %568 = vmatprep.subr.bf16.mxu0 0
        %569 = vmatpush1.bf16.msra.mxu0 0
        %570 = vmatprep.subr.bf16.mxu0 0
        %571 = vmatpush1.bf16.msra.mxu0 0
        %572 = vmatprep.subr.bf16.mxu0 0
        %573 = vmatpush1.bf16.msra.mxu0 0
        %574 = vmatprep.subr.bf16.mxu0 0
        %575 = vmatpush1.bf16.msra.mxu0 0
        %576 = vmatprep.subr.bf16.mxu0 0
        %577 = vmatpush1.bf16.msra.mxu0 0
        %578 = vmatprep.subr.bf16.mxu0 %v432
        %579 = vmatpush1.bf16.msra.mxu0 %v431
        %580 = vmatprep.subr.bf16.mxu0 %v428
        %581 = vmatpush1.bf16.msra.mxu0 %v427
        %582 = vmatprep.subr.bf16.mxu0 0
        %583 = vmatpush2.bf16.msra.mxu0 0
        %584 = vmatprep.subr.bf16.mxu0 0
        %585 = vmatpush2.bf16.msra.mxu0 0
        %586 = vmatprep.subr.bf16.mxu0 0
        %587 = vmatpush2.bf16.msra.mxu0 0
        %588 = vmatprep.subr.bf16.mxu0 0
        %589 = vmatpush2.bf16.msra.mxu0 0
        %590 = vmatprep.subr.bf16.mxu0 0
        %591 = vmatpush2.bf16.msra.mxu0 0
        %592 = vmatprep.subr.bf16.mxu0 0
        %593 = vmatpush2.bf16.msra.mxu0 0
        %594 = vmatprep.subr.bf16.mxu0 0
        %595 = vmatpush2.bf16.msra.mxu0 0
        %596 = vmatprep.subr.bf16.mxu0 0
        %597 = vmatpush2.bf16.msra.mxu0 0
        %598 = vmatprep.mubr.bf16.mxu0 0
        %599 = vmatmul.mubr.bf16.gmra.mxu0 %v443
        %v600 = vpop.f32.mrf.mxu0
        %v601 = vadd.f32 %v392, %v600
        %v602 = vpop.f32.mrf.mxu0
        %v603 = vadd.f32 %v396, %v602
        %v604 = vpop.f32.mrf.mxu0
        %v605 = vadd.f32 %v392, %v604
        %v606 = vpop.f32.mrf.mxu0
        %v607 = vadd.f32 %v396, %v606
        %608 = vmatprep.mubr.bf16.mxu0 0
        %609 = vmatmul.mubr.bf16.gmra.mxu0 %v446
        %v610 = vpop.f32.mrf.mxu0
        %v611 = vadd.f32 %v392, %v610
        %v612 = vpop.f32.mrf.mxu0
        %v613 = vadd.f32 %v396, %v612
        %v614 = vpop.f32.mrf.mxu0
        %v615 = vadd.f32 %v392, %v614
        %v616 = vpop.f32.mrf.mxu0
        %v617 = vadd.f32 %v396, %v616
        %618 = vmatprep.mubr.bf16.mxu0 0
        %619 = vmatmul.mubr.bf16.gmra.mxu0 %v449
        %v620 = vpop.f32.mrf.mxu0
        %v621 = vadd.f32 %v392, %v620
        %v622 = vpop.f32.mrf.mxu0
        %v623 = vadd.f32 %v396, %v622
        %v624 = vpop.f32.mrf.mxu0
        %v625 = vadd.f32 %v392, %v624
        %v626 = vpop.f32.mrf.mxu0
        %v627 = vadd.f32 %v396, %v626
        %628 = vmatprep.mubr.bf16.mxu0 0
        %629 = vmatmul.mubr.bf16.gmra.mxu0 %v452
        %v630 = vpop.f32.mrf.mxu0
        %v631 = vadd.f32 %v392, %v630
        %v632 = vpop.f32.mrf.mxu0
        %v633 = vadd.f32 %v396, %v632
        %v634 = vpop.f32.mrf.mxu0
        %v635 = vadd.f32 %v392, %v634
        %v636 = vpop.f32.mrf.mxu0
        %v637 = vadd.f32 %v396, %v636
        %638 = vmatprep.mubr.bf16.mxu0 0
        %639 = vmatmul.mubr.bf16.gmra.mxu0 %v455
        %v640 = vpop.f32.mrf.mxu0
        %v641 = vadd.f32 %v392, %v640
        %v642 = vpop.f32.mrf.mxu0
        %v643 = vadd.f32 %v396, %v642
        %v644 = vpop.f32.mrf.mxu0
        %v645 = vadd.f32 %v392, %v644
        %v646 = vpop.f32.mrf.mxu0
        %v647 = vadd.f32 %v396, %v646
        %648 = vmatprep.mubr.bf16.mxu0 0
        %649 = vmatmul.mubr.bf16.gmra.mxu0 %v458
        %v650 = vpop.f32.mrf.mxu0
        %v651 = vadd.f32 %v392, %v650
        %v652 = vpop.f32.mrf.mxu0
        %v653 = vadd.f32 %v396, %v652
        %v654 = vpop.f32.mrf.mxu0
        %v655 = vadd.f32 %v392, %v654
        %v656 = vpop.f32.mrf.mxu0
        %v657 = vadd.f32 %v396, %v656
        %658 = vmatprep.mubr.bf16.mxu0 0
        %659 = vmatmul.mubr.bf16.gmra.mxu0 %v461
        %v660 = vpop.f32.mrf.mxu0
        %v661 = vadd.f32 %v392, %v660
        %v662 = vpop.f32.mrf.mxu0
        %v663 = vadd.f32 %v396, %v662
        %v664 = vpop.f32.mrf.mxu0
        %v665 = vadd.f32 %v392, %v664
        %v666 = vpop.f32.mrf.mxu0
        %v667 = vadd.f32 %v396, %v666
        %668 = vdwg.mxu0
        %v669 = vmax.f32 %v498, 0.0
        %v670 = vmax.f32 %v500, 0.0
        %v671 = vmax.f32 %v601, 0.0
        %v672 = vmax.f32 %v603, 0.0
        %v673 = vmax.f32 %v502, 0.0
        %v674 = vmax.f32 %v504, 0.0
        %v675 = vmax.f32 %v605, 0.0
        %v676 = vmax.f32 %v607, 0.0
        %v677 = vmax.f32 %v508, 0.0
        %v678 = vmax.f32 %v510, 0.0
        %v679 = vmax.f32 %v611, 0.0
        %v680 = vmax.f32 %v613, 0.0
        %v681 = vmax.f32 %v512, 0.0
        %v682 = vmax.f32 %v514, 0.0
        %v683 = vmax.f32 %v615, 0.0
        %v684 = vmax.f32 %v617, 0.0
        %v685 = vmax.f32 %v518, 0.0
        %v686 = vmax.f32 %v520, 0.0
        %v687 = vmax.f32 %v621, 0.0
        %v688 = vmax.f32 %v623, 0.0
        %v689 = vmax.f32 %v522, 0.0
        %v690 = vmax.f32 %v524, 0.0
        %v691 = vmax.f32 %v625, 0.0
        %v692 = vmax.f32 %v627, 0.0
        %v693 = vmax.f32 %v528, 0.0
        %v694 = vmax.f32 %v530, 0.0
        %v695 = vmax.f32 %v631, 0.0
        %v696 = vmax.f32 %v633, 0.0
        %v697 = vmax.f32 %v532, 0.0
        %v698 = vmax.f32 %v534, 0.0
        %v699 = vmax.f32 %v635, 0.0
        %v700 = vmax.f32 %v637, 0.0
        %v701 = vmax.f32 %v538, 0.0
        %v702 = vmax.f32 %v540, 0.0
        %v703 = vmax.f32 %v641, 0.0
        %v704 = vmax.f32 %v643, 0.0
        %v705 = vmax.f32 %v542, 0.0
        %v706 = vmax.f32 %v544, 0.0
        %v707 = vmax.f32 %v645, 0.0
        %v708 = vmax.f32 %v647, 0.0
        %v709 = vmax.f32 %v548, 0.0
        %v710 = vmax.f32 %v550, 0.0
        %v711 = vmax.f32 %v651, 0.0
        %v712 = vmax.f32 %v653, 0.0
        %v713 = vmax.f32 %v552, 0.0
        %v714 = vmax.f32 %v554, 0.0
        %v715 = vmax.f32 %v655, 0.0
        %v716 = vmax.f32 %v657, 0.0
        %v717 = vmax.f32 %v558, 0.0
        %v718 = vmax.f32 %v560, 0.0
        %v719 = vmax.f32 %v661, 0.0
        %v720 = vmax.f32 %v663, 0.0
        %v721 = vmax.f32 %v562, 0.0
        %v722 = vmax.f32 %v564, 0.0
        %v723 = vmax.f32 %v665, 0.0
        %v724 = vmax.f32 %v667, 0.0
        %v725 = vpack.c.bf16 %v673, %v669
        %v726 = vpack.c.bf16 %v674, %v670
        %v727 = vpack.c.bf16 %v675, %v671
        %v728 = vpack.c.bf16 %v676, %v672
        %v729 = vpack.c.bf16 %v681, %v677
        %v730 = vpack.c.bf16 %v682, %v678
        %v731 = vpack.c.bf16 %v683, %v679
        %v732 = vpack.c.bf16 %v684, %v680
        %v733 = vpack.c.bf16 %v689, %v685
        %v734 = vpack.c.bf16 %v690, %v686
        %v735 = vpack.c.bf16 %v691, %v687
        %v736 = vpack.c.bf16 %v692, %v688
        %v737 = vpack.c.bf16 %v697, %v693
        %v738 = vpack.c.bf16 %v698, %v694
        %v739 = vpack.c.bf16 %v699, %v695
        %v740 = vpack.c.bf16 %v700, %v696
        %v741 = vpack.c.bf16 %v705, %v701
        %v742 = vpack.c.bf16 %v706, %v702
        %v743 = vpack.c.bf16 %v707, %v703
        %v744 = vpack.c.bf16 %v708, %v704
        %v745 = vpack.c.bf16 %v713, %v709
        %v746 = vpack.c.bf16 %v714, %v710
        %v747 = vpack.c.bf16 %v715, %v711
        %v748 = vpack.c.bf16 %v716, %v712
        %v749 = vpack.c.bf16 %v721, %v717
        %v750 = vpack.c.bf16 %v722, %v718
        %v751 = vpack.c.bf16 %v723, %v719
        %v752 = vpack.c.bf16 %v724, %v720
        %v753 = vld [vmem:[#allocation2] sm:$0xff]
        %v754 = vld [vmem:[#allocation2 + $0x8] sm:$0xff]
        %v755 = vld [vmem:[#allocation2 + $0x10] sm:$0xff]
        %v756 = vld [vmem:[#allocation2 + $0x18] sm:$0xff]
        %v757 = vld [vmem:[#allocation2 + $0x20] sm:$0xff]
        %v758 = vld [vmem:[#allocation2 + $0x28] sm:$0xff]
        %v759 = vld [vmem:[#allocation2 + $0x30] sm:$0xff]
        %v760 = vld [vmem:[#allocation2 + $0x38] sm:$0xff]
        %v761 = vld [vmem:[#allocation2 + $0x40] sm:$0xff]
        %v762 = vld [vmem:[#allocation2 + $0x48] sm:$0xff]
        %v763 = vld [vmem:[#allocation2 + $0x50] sm:$0xff]
        %v764 = vld [vmem:[#allocation2 + $0x58] sm:$0xff]
        %v765 = vld [vmem:[#allocation2 + $0x60] sm:$0xff]
        %v766 = vld [vmem:[#allocation2 + $0x68] sm:$0xff]
        %v767 = vld [vmem:[#allocation2 + $0x70] sm:$0xff]
        %v768 = vld [vmem:[#allocation2 + $0x78] sm:$0xff]
        %v769 = vld [vmem:[#allocation2 + $0x80] sm:$0xff]
        %v770 = vld [vmem:[#allocation2 + $0x88] sm:$0xff]
        %v771 = vld [vmem:[#allocation2 + $0x90] sm:$0xff]
        %v772 = vld [vmem:[#allocation2 + $0x98] sm:$0xff]
        %v773 = vld [vmem:[#allocation2 + $0xa0] sm:$0xff]
        %v774 = vld [vmem:[#allocation2 + $0xa8] sm:$0xff]
        %v775 = vld [vmem:[#allocation2 + $0xb0] sm:$0xff]
        %v776 = vld [vmem:[#allocation2 + $0xb8] sm:$0xff]
        %v777 = vld [vmem:[#allocation2 + $0xc0] sm:$0xff]
        %v778 = vld [vmem:[#allocation2 + $0xc8] sm:$0xff]
        %v779 = vld [vmem:[#allocation2 + $0xd0] sm:$0xff]
        %v780 = vld [vmem:[#allocation2 + $0xd8] sm:$0xff]
        %v781 = vld [vmem:[#allocation2 + $0xe0] sm:$0xff]
        %v782 = vld [vmem:[#allocation2 + $0xe8] sm:$0xff]
        %v783 = vld [vmem:[#allocation2 + $0xf0] sm:$0xff]
        %v784 = vld [vmem:[#allocation2 + $0xf8] sm:$0xff]
        %v785 = vld [vmem:[#allocation2 + $0x100] sm:$0xff]
        %v786 = vld [vmem:[#allocation2 + $0x108] sm:$0xff]
        %v787 = vld [vmem:[#allocation2 + $0x110] sm:$0xff]
        %v788 = vld [vmem:[#allocation2 + $0x118] sm:$0xff]
        %v789 = vld [vmem:[#allocation2 + $0x120] sm:$0xff]
        %v790 = vld [vmem:[#allocation2 + $0x128] sm:$0xff]
        %v791 = vld [vmem:[#allocation2 + $0x130] sm:$0xff]
        %v792 = vld [vmem:[#allocation2 + $0x138] sm:$0xff]
        %v793 = vld [vmem:[#allocation2 + $0x140] sm:$0xff]
        %v794 = vld [vmem:[#allocation2 + $0x148] sm:$0xff]
        %v795 = vld [vmem:[#allocation2 + $0x150] sm:$0xff]
        %v796 = vld [vmem:[#allocation2 + $0x158] sm:$0xff]
        %v797 = vld [vmem:[#allocation2 + $0x160] sm:$0xff]
        %v798 = vld [vmem:[#allocation2 + $0x168] sm:$0xff]
        %v799 = vld [vmem:[#allocation2 + $0x170] sm:$0xff]
        %v800 = vld [vmem:[#allocation2 + $0x178] sm:$0xff]
        %v801 = vld [vmem:[#allocation2 + $0x180] sm:$0xff]
        %v802 = vld [vmem:[#allocation2 + $0x188] sm:$0xff]
        %v803 = vld [vmem:[#allocation2 + $0x190] sm:$0xff]
        %v804 = vld [vmem:[#allocation2 + $0x198] sm:$0xff]
        %v805 = vld [vmem:[#allocation2 + $0x1a0] sm:$0xff]
        %v806 = vld [vmem:[#allocation2 + $0x1a8] sm:$0xff]
        %v807 = vld [vmem:[#allocation2 + $0x1b0] sm:$0xff]
        %v808 = vld [vmem:[#allocation2 + $0x1b8] sm:$0xff]
        %v809 = vld [vmem:[#allocation2 + $0x1c0] sm:$0xff]
        %v810 = vld [vmem:[#allocation2 + $0x1c8] sm:$0xff]
        %v811 = vld [vmem:[#allocation2 + $0x1d0] sm:$0xff]
        %v812 = vld [vmem:[#allocation2 + $0x1d8] sm:$0xff]
        %v813 = vld [vmem:[#allocation2 + $0x1e0] sm:$0xff]
        %v814 = vld [vmem:[#allocation2 + $0x1e8] sm:$0xff]
        %v815 = vld [vmem:[#allocation2 + $0x1f0] sm:$0xff]
        %v816 = vld [vmem:[#allocation2 + $0x1f8] sm:$0xff]
        %v817 = vld [vmem:[%s4] sm:$0x3]
        %v819 = vlaneseq
        %v820 = vshrl.u32 %v819, 7
        %v821 = vsub.s32 0, %v820
        %v822 = vrot.slane %v817, %v821
        %v823 = vlaneseq
        %v824 = vshrl.u32 %v823, 7
        %v825 = vsub.s32 1, %v824
        %v826 = vrot.slane %v817, %v825
        %v893 = vunpack.c.l.b16 %v753
        %v894 = vunpack.c.h.b16 %v753
        %v895 = vunpack.c.l.b16 %v754
        %v896 = vunpack.c.h.b16 %v754
        %v897 = vunpack.c.l.b16 %v755
        %v898 = vunpack.c.h.b16 %v755
        %v899 = vunpack.c.l.b16 %v756
        %v900 = vunpack.c.h.b16 %v756
        %v901 = vunpack.c.l.b16 %v757
        %v902 = vunpack.c.h.b16 %v757
        %v903 = vunpack.c.l.b16 %v758
        %v904 = vunpack.c.h.b16 %v758
        %v905 = vunpack.c.l.b16 %v759
        %v906 = vunpack.c.h.b16 %v759
        %v907 = vunpack.c.l.b16 %v760
        %v908 = vunpack.c.h.b16 %v760
        %v909 = vunpack.c.l.b16 %v761
        %v910 = vunpack.c.h.b16 %v761
        %v911 = vunpack.c.l.b16 %v762
        %v912 = vunpack.c.h.b16 %v762
        %v913 = vunpack.c.l.b16 %v763
        %v914 = vunpack.c.h.b16 %v763
        %v915 = vunpack.c.l.b16 %v764
        %v916 = vunpack.c.h.b16 %v764
        %v917 = vunpack.c.l.b16 %v765
        %v918 = vunpack.c.h.b16 %v765
        %v919 = vunpack.c.l.b16 %v766
        %v920 = vunpack.c.h.b16 %v766
        %v921 = vunpack.c.l.b16 %v767
        %v922 = vunpack.c.h.b16 %v767
        %v923 = vunpack.c.l.b16 %v768
        %v924 = vunpack.c.h.b16 %v768
        %v925 = vunpack.c.l.b16 %v769
        %v926 = vunpack.c.h.b16 %v769
        %v927 = vunpack.c.l.b16 %v770
        %v928 = vunpack.c.h.b16 %v770
        %v929 = vunpack.c.l.b16 %v771
        %v930 = vunpack.c.h.b16 %v771
        %v931 = vunpack.c.l.b16 %v772
        %v932 = vunpack.c.h.b16 %v772
        %v933 = vunpack.c.l.b16 %v773
        %v934 = vunpack.c.h.b16 %v773
        %v935 = vunpack.c.l.b16 %v774
        %v936 = vunpack.c.h.b16 %v774
        %v937 = vunpack.c.l.b16 %v775
        %v938 = vunpack.c.h.b16 %v775
        %v939 = vunpack.c.l.b16 %v776
        %v940 = vunpack.c.h.b16 %v776
        %v941 = vunpack.c.l.b16 %v777
        %v942 = vunpack.c.h.b16 %v777
        %v943 = vunpack.c.l.b16 %v778
        %v944 = vunpack.c.h.b16 %v778
        %v945 = vunpack.c.l.b16 %v779
        %v946 = vunpack.c.h.b16 %v779
        %v947 = vunpack.c.l.b16 %v780
        %v948 = vunpack.c.h.b16 %v780
        %v949 = vunpack.c.l.b16 %v781
        %v950 = vunpack.c.h.b16 %v781
        %v951 = vunpack.c.l.b16 %v782
        %v952 = vunpack.c.h.b16 %v782
        %v953 = vunpack.c.l.b16 %v783
        %v954 = vunpack.c.h.b16 %v783
        %v955 = vunpack.c.l.b16 %v784
        %v956 = vunpack.c.h.b16 %v784
        %v957 = vunpack.c.l.b16 %v785
        %v958 = vunpack.c.h.b16 %v785
        %v959 = vunpack.c.l.b16 %v786
        %v960 = vunpack.c.h.b16 %v786
        %v961 = vunpack.c.l.b16 %v787
        %v962 = vunpack.c.h.b16 %v787
        %v963 = vunpack.c.l.b16 %v788
        %v964 = vunpack.c.h.b16 %v788
        %v965 = vunpack.c.l.b16 %v789
        %v966 = vunpack.c.h.b16 %v789
        %v967 = vunpack.c.l.b16 %v790
        %v968 = vunpack.c.h.b16 %v790
        %v969 = vunpack.c.l.b16 %v791
        %v970 = vunpack.c.h.b16 %v791
        %v971 = vunpack.c.l.b16 %v792
        %v972 = vunpack.c.h.b16 %v792
        %v973 = vunpack.c.l.b16 %v793
        %v974 = vunpack.c.h.b16 %v793
        %v975 = vunpack.c.l.b16 %v794
        %v976 = vunpack.c.h.b16 %v794
        %v977 = vunpack.c.l.b16 %v795
        %v978 = vunpack.c.h.b16 %v795
        %v979 = vunpack.c.l.b16 %v796
        %v980 = vunpack.c.h.b16 %v796
        %v981 = vunpack.c.l.b16 %v797
        %v982 = vunpack.c.h.b16 %v797
        %v983 = vunpack.c.l.b16 %v798
        %v984 = vunpack.c.h.b16 %v798
        %v985 = vunpack.c.l.b16 %v799
        %v986 = vunpack.c.h.b16 %v799
        %v987 = vunpack.c.l.b16 %v800
        %v988 = vunpack.c.h.b16 %v800
        %v989 = vunpack.c.l.b16 %v801
        %v990 = vunpack.c.h.b16 %v801
        %v991 = vunpack.c.l.b16 %v802
        %v992 = vunpack.c.h.b16 %v802
        %v993 = vunpack.c.l.b16 %v803
        %v994 = vunpack.c.h.b16 %v803
        %v995 = vunpack.c.l.b16 %v804
        %v996 = vunpack.c.h.b16 %v804
        %v997 = vunpack.c.l.b16 %v805
        %v998 = vunpack.c.h.b16 %v805
        %v999 = vunpack.c.l.b16 %v806
        %v1000 = vunpack.c.h.b16 %v806
        %v1001 = vunpack.c.l.b16 %v807
        %v1002 = vunpack.c.h.b16 %v807
        %v1003 = vunpack.c.l.b16 %v808
        %v1004 = vunpack.c.h.b16 %v808
        %v1005 = vunpack.c.l.b16 %v809
        %v1006 = vunpack.c.h.b16 %v809
        %v1007 = vunpack.c.l.b16 %v810
        %v1008 = vunpack.c.h.b16 %v810
        %v1009 = vunpack.c.l.b16 %v811
        %v1010 = vunpack.c.h.b16 %v811
        %v1011 = vunpack.c.l.b16 %v812
        %v1012 = vunpack.c.h.b16 %v812
        %v1013 = vunpack.c.l.b16 %v813
        %v1014 = vunpack.c.h.b16 %v813
        %v1015 = vunpack.c.l.b16 %v814
        %v1016 = vunpack.c.h.b16 %v814
        %v1017 = vunpack.c.l.b16 %v815
        %v1018 = vunpack.c.h.b16 %v815
        %v1019 = vunpack.c.l.b16 %v816
        %v1020 = vunpack.c.h.b16 %v816
        %v1021 = vpack.c.b16 %v895, %v893
        %v1022 = vpack.c.b16 %v896, %v894
        %v1023 = vpack.c.b16 %v899, %v897
        %v1024 = vpack.c.b16 %v900, %v898
        %v1025 = vpack.c.b16 %v903, %v901
        %v1026 = vpack.c.b16 %v904, %v902
        %v1027 = vpack.c.b16 %v907, %v905
        %v1028 = vpack.c.b16 %v908, %v906
        %v1029 = vpack.c.b16 %v911, %v909
        %v1030 = vpack.c.b16 %v912, %v910
        %v1031 = vpack.c.b16 %v915, %v913
        %v1032 = vpack.c.b16 %v916, %v914
        %v1033 = vpack.c.b16 %v919, %v917
        %v1034 = vpack.c.b16 %v920, %v918
        %v1035 = vpack.c.b16 %v923, %v921
        %v1036 = vpack.c.b16 %v924, %v922
        %v1037 = vpack.c.b16 %v927, %v925
        %v1038 = vpack.c.b16 %v928, %v926
        %v1039 = vpack.c.b16 %v931, %v929
        %v1040 = vpack.c.b16 %v932, %v930
        %v1041 = vpack.c.b16 %v935, %v933
        %v1042 = vpack.c.b16 %v936, %v934
        %v1043 = vpack.c.b16 %v939, %v937
        %v1044 = vpack.c.b16 %v940, %v938
        %v1045 = vpack.c.b16 %v943, %v941
        %v1046 = vpack.c.b16 %v944, %v942
        %v1047 = vpack.c.b16 %v947, %v945
        %v1048 = vpack.c.b16 %v948, %v946
        %v1049 = vpack.c.b16 %v951, %v949
        %v1050 = vpack.c.b16 %v952, %v950
        %v1051 = vpack.c.b16 %v955, %v953
        %v1052 = vpack.c.b16 %v956, %v954
        %v1053 = vpack.c.b16 %v959, %v957
        %v1054 = vpack.c.b16 %v960, %v958
        %v1055 = vpack.c.b16 %v963, %v961
        %v1056 = vpack.c.b16 %v964, %v962
        %v1057 = vpack.c.b16 %v967, %v965
        %v1058 = vpack.c.b16 %v968, %v966
        %v1059 = vpack.c.b16 %v971, %v969
        %v1060 = vpack.c.b16 %v972, %v970
        %v1061 = vpack.c.b16 %v975, %v973
        %v1062 = vpack.c.b16 %v976, %v974
        %v1063 = vpack.c.b16 %v979, %v977
        %v1064 = vpack.c.b16 %v980, %v978
        %v1065 = vpack.c.b16 %v983, %v981
        %v1066 = vpack.c.b16 %v984, %v982
        %v1067 = vpack.c.b16 %v987, %v985
        %v1068 = vpack.c.b16 %v988, %v986
        %v1069 = vpack.c.b16 %v991, %v989
        %v1070 = vpack.c.b16 %v992, %v990
        %v1071 = vpack.c.b16 %v995, %v993
        %v1072 = vpack.c.b16 %v996, %v994
        %v1073 = vpack.c.b16 %v999, %v997
        %v1074 = vpack.c.b16 %v1000, %v998
        %v1075 = vpack.c.b16 %v1003, %v1001
        %v1076 = vpack.c.b16 %v1004, %v1002
        %v1077 = vpack.c.b16 %v1007, %v1005
        %v1078 = vpack.c.b16 %v1008, %v1006
        %v1079 = vpack.c.b16 %v1011, %v1009
        %v1080 = vpack.c.b16 %v1012, %v1010
        %v1081 = vpack.c.b16 %v1015, %v1013
        %v1082 = vpack.c.b16 %v1016, %v1014
        %v1083 = vpack.c.b16 %v1019, %v1017
        %v1084 = vpack.c.b16 %v1020, %v1018
        %1149 = vmatprep.subr.bf16.mxu0 %v1036
        %1150 = vmatpush1.bf16.msra.mxu0 %v1035
        %1151 = vmatprep.subr.bf16.mxu0 %v1034
        %1152 = vmatpush1.bf16.msra.mxu0 %v1033
        %1153 = vmatprep.subr.bf16.mxu0 %v1032
        %1154 = vmatpush1.bf16.msra.mxu0 %v1031
        %1155 = vmatprep.subr.bf16.mxu0 %v1030
        %1156 = vmatpush1.bf16.msra.mxu0 %v1029
        %1157 = vmatprep.subr.bf16.mxu0 %v1028
        %1158 = vmatpush1.bf16.msra.mxu0 %v1027
        %1159 = vmatprep.subr.bf16.mxu0 %v1026
        %1160 = vmatpush1.bf16.msra.mxu0 %v1025
        %1161 = vmatprep.subr.bf16.mxu0 %v1024
        %1162 = vmatpush1.bf16.msra.mxu0 %v1023
        %1163 = vmatprep.subr.bf16.mxu0 %v1022
        %1164 = vmatpush1.bf16.msra.mxu0 %v1021
        %1165 = vmatprep.subr.bf16.mxu0 %v1052
        %1166 = vmatpush2.bf16.msra.mxu0 %v1051
        %1167 = vmatprep.subr.bf16.mxu0 %v1050
        %1168 = vmatpush2.bf16.msra.mxu0 %v1049
        %1169 = vmatprep.subr.bf16.mxu0 %v1048
        %1170 = vmatpush2.bf16.msra.mxu0 %v1047
        %1171 = vmatprep.subr.bf16.mxu0 %v1046
        %1172 = vmatpush2.bf16.msra.mxu0 %v1045
        %1173 = vmatprep.subr.bf16.mxu0 %v1044
        %1174 = vmatpush2.bf16.msra.mxu0 %v1043
        %1175 = vmatprep.subr.bf16.mxu0 %v1042
        %1176 = vmatpush2.bf16.msra.mxu0 %v1041
        %1177 = vmatprep.subr.bf16.mxu0 %v1040
        %1178 = vmatpush2.bf16.msra.mxu0 %v1039
        %1179 = vmatprep.subr.bf16.mxu0 %v1038
        %1180 = vmatpush2.bf16.msra.mxu0 %v1037
        %1181 = vmatprep.mubr.bf16.mxu0 %v726
        %1182 = vmatmul.mubr.bf16.gmra.mxu0 %v725
        %v1183 = vpop.f32.mrf.mxu0
        %v1184 = vadd.f32 %v822, %v1183
        %v1185 = vpop.f32.mrf.mxu0
        %v1186 = vadd.f32 %v826, %v1185
        %v1187 = vpop.f32.mrf.mxu0
        %v1188 = vadd.f32 %v822, %v1187
        %v1189 = vpop.f32.mrf.mxu0
        %v1190 = vadd.f32 %v826, %v1189
        %1191 = vmatprep.mubr.bf16.mxu0 %v730
        %1192 = vmatmul.mubr.bf16.gmra.mxu0 %v729
        %v1193 = vpop.f32.mrf.mxu0
        %v1194 = vadd.f32 %v822, %v1193
        %v1195 = vpop.f32.mrf.mxu0
        %v1196 = vadd.f32 %v826, %v1195
        %v1197 = vpop.f32.mrf.mxu0
        %v1198 = vadd.f32 %v822, %v1197
        %v1199 = vpop.f32.mrf.mxu0
        %v1200 = vadd.f32 %v826, %v1199
        %1201 = vmatprep.mubr.bf16.mxu0 %v734
        %1202 = vmatmul.mubr.bf16.gmra.mxu0 %v733
        %v1203 = vpop.f32.mrf.mxu0
        %v1204 = vadd.f32 %v822, %v1203
        %v1205 = vpop.f32.mrf.mxu0
        %v1206 = vadd.f32 %v826, %v1205
        %v1207 = vpop.f32.mrf.mxu0
        %v1208 = vadd.f32 %v822, %v1207
        %v1209 = vpop.f32.mrf.mxu0
        %v1210 = vadd.f32 %v826, %v1209
        %1211 = vmatprep.mubr.bf16.mxu0 %v738
        %1212 = vmatmul.mubr.bf16.gmra.mxu0 %v737
        %v1213 = vpop.f32.mrf.mxu0
        %v1214 = vadd.f32 %v822, %v1213
        %v1215 = vpop.f32.mrf.mxu0
        %v1216 = vadd.f32 %v826, %v1215
        %v1217 = vpop.f32.mrf.mxu0
        %v1218 = vadd.f32 %v822, %v1217
        %v1219 = vpop.f32.mrf.mxu0
        %v1220 = vadd.f32 %v826, %v1219
        %1221 = vmatprep.mubr.bf16.mxu0 %v742
        %1222 = vmatmul.mubr.bf16.gmra.mxu0 %v741
        %v1223 = vpop.f32.mrf.mxu0
        %v1224 = vadd.f32 %v822, %v1223
        %v1225 = vpop.f32.mrf.mxu0
        %v1226 = vadd.f32 %v826, %v1225
        %v1227 = vpop.f32.mrf.mxu0
        %v1228 = vadd.f32 %v822, %v1227
        %v1229 = vpop.f32.mrf.mxu0
        %v1230 = vadd.f32 %v826, %v1229
        %1231 = vmatprep.mubr.bf16.mxu0 %v746
        %1232 = vmatmul.mubr.bf16.gmra.mxu0 %v745
        %v1233 = vpop.f32.mrf.mxu0
        %v1234 = vadd.f32 %v822, %v1233
        %v1235 = vpop.f32.mrf.mxu0
        %v1236 = vadd.f32 %v826, %v1235
        %v1237 = vpop.f32.mrf.mxu0
        %v1238 = vadd.f32 %v822, %v1237
        %v1239 = vpop.f32.mrf.mxu0
        %v1240 = vadd.f32 %v826, %v1239
        %1241 = vmatprep.mubr.bf16.mxu0 %v750
        %1242 = vmatmul.mubr.bf16.gmra.mxu0 %v749
        %v1243 = vpop.f32.mrf.mxu0
        %v1244 = vadd.f32 %v822, %v1243
        %v1245 = vpop.f32.mrf.mxu0
        %v1246 = vadd.f32 %v826, %v1245
        %v1247 = vpop.f32.mrf.mxu0
        %v1248 = vadd.f32 %v822, %v1247
        %v1249 = vpop.f32.mrf.mxu0
        %v1250 = vadd.f32 %v826, %v1249
        %1251 = vdwg.mxu0
        %1252 = vmatprep.subr.bf16.mxu0 %v1068
        %1253 = vmatpush1.bf16.msra.mxu0 %v1067
        %1254 = vmatprep.subr.bf16.mxu0 %v1066
        %1255 = vmatpush1.bf16.msra.mxu0 %v1065
        %1256 = vmatprep.subr.bf16.mxu0 %v1064
        %1257 = vmatpush1.bf16.msra.mxu0 %v1063
        %1258 = vmatprep.subr.bf16.mxu0 %v1062
        %1259 = vmatpush1.bf16.msra.mxu0 %v1061
        %1260 = vmatprep.subr.bf16.mxu0 %v1060
        %1261 = vmatpush1.bf16.msra.mxu0 %v1059
        %1262 = vmatprep.subr.bf16.mxu0 %v1058
        %1263 = vmatpush1.bf16.msra.mxu0 %v1057
        %1264 = vmatprep.subr.bf16.mxu0 %v1056
        %1265 = vmatpush1.bf16.msra.mxu0 %v1055
        %1266 = vmatprep.subr.bf16.mxu0 %v1054
        %1267 = vmatpush1.bf16.msra.mxu0 %v1053
        %1268 = vmatprep.subr.bf16.mxu0 %v1084
        %1269 = vmatpush2.bf16.msra.mxu0 %v1083
        %1270 = vmatprep.subr.bf16.mxu0 %v1082
        %1271 = vmatpush2.bf16.msra.mxu0 %v1081
        %1272 = vmatprep.subr.bf16.mxu0 %v1080
        %1273 = vmatpush2.bf16.msra.mxu0 %v1079
        %1274 = vmatprep.subr.bf16.mxu0 %v1078
        %1275 = vmatpush2.bf16.msra.mxu0 %v1077
        %1276 = vmatprep.subr.bf16.mxu0 %v1076
        %1277 = vmatpush2.bf16.msra.mxu0 %v1075
        %1278 = vmatprep.subr.bf16.mxu0 %v1074
        %1279 = vmatpush2.bf16.msra.mxu0 %v1073
        %1280 = vmatprep.subr.bf16.mxu0 %v1072
        %1281 = vmatpush2.bf16.msra.mxu0 %v1071
        %1282 = vmatprep.subr.bf16.mxu0 %v1070
        %1283 = vmatpush2.bf16.msra.mxu0 %v1069
        %1284 = vmatprep.mubr.bf16.mxu0 %v728
        %1285 = vmatmul.mubr.bf16.gmra.mxu0 %v727
        %v1286 = vpop.f32.mrf.mxu0
        %v1287 = vadd.f32 %v1184, %v1286
        %v1288 = vpop.f32.mrf.mxu0
        %v1289 = vadd.f32 %v1186, %v1288
        %v1290 = vpop.f32.mrf.mxu0
        %v1291 = vadd.f32 %v1188, %v1290
        %v1292 = vpop.f32.mrf.mxu0
        %v1293 = vadd.f32 %v1190, %v1292
        %1294 = vmatprep.mubr.bf16.mxu0 %v732
        %1295 = vmatmul.mubr.bf16.gmra.mxu0 %v731
        %v1296 = vpop.f32.mrf.mxu0
        %v1297 = vadd.f32 %v1194, %v1296
        %v1298 = vpop.f32.mrf.mxu0
        %v1299 = vadd.f32 %v1196, %v1298
        %v1300 = vpop.f32.mrf.mxu0
        %v1301 = vadd.f32 %v1198, %v1300
        %v1302 = vpop.f32.mrf.mxu0
        %v1303 = vadd.f32 %v1200, %v1302
        %1304 = vmatprep.mubr.bf16.mxu0 %v736
        %1305 = vmatmul.mubr.bf16.gmra.mxu0 %v735
        %v1306 = vpop.f32.mrf.mxu0
        %v1307 = vadd.f32 %v1204, %v1306
        %v1308 = vpop.f32.mrf.mxu0
        %v1309 = vadd.f32 %v1206, %v1308
        %v1310 = vpop.f32.mrf.mxu0
        %v1311 = vadd.f32 %v1208, %v1310
        %v1312 = vpop.f32.mrf.mxu0
        %v1313 = vadd.f32 %v1210, %v1312
        %1314 = vmatprep.mubr.bf16.mxu0 %v740
        %1315 = vmatmul.mubr.bf16.gmra.mxu0 %v739
        %v1316 = vpop.f32.mrf.mxu0
        %v1317 = vadd.f32 %v1214, %v1316
        %v1318 = vpop.f32.mrf.mxu0
        %v1319 = vadd.f32 %v1216, %v1318
        %v1320 = vpop.f32.mrf.mxu0
        %v1321 = vadd.f32 %v1218, %v1320
        %v1322 = vpop.f32.mrf.mxu0
        %v1323 = vadd.f32 %v1220, %v1322
        %1324 = vmatprep.mubr.bf16.mxu0 %v744
        %1325 = vmatmul.mubr.bf16.gmra.mxu0 %v743
        %v1326 = vpop.f32.mrf.mxu0
        %v1327 = vadd.f32 %v1224, %v1326
        %v1328 = vpop.f32.mrf.mxu0
        %v1329 = vadd.f32 %v1226, %v1328
        %v1330 = vpop.f32.mrf.mxu0
        %v1331 = vadd.f32 %v1228, %v1330
        %v1332 = vpop.f32.mrf.mxu0
        %v1333 = vadd.f32 %v1230, %v1332
        %1334 = vmatprep.mubr.bf16.mxu0 %v748
        %1335 = vmatmul.mubr.bf16.gmra.mxu0 %v747
        %v1336 = vpop.f32.mrf.mxu0
        %v1337 = vadd.f32 %v1234, %v1336
        %v1338 = vpop.f32.mrf.mxu0
        %v1339 = vadd.f32 %v1236, %v1338
        %v1340 = vpop.f32.mrf.mxu0
        %v1341 = vadd.f32 %v1238, %v1340
        %v1342 = vpop.f32.mrf.mxu0
        %v1343 = vadd.f32 %v1240, %v1342
        %1344 = vmatprep.mubr.bf16.mxu0 %v752
        %1345 = vmatmul.mubr.bf16.gmra.mxu0 %v751
        %v1346 = vpop.f32.mrf.mxu0
        %v1347 = vadd.f32 %v1244, %v1346
        %v1348 = vpop.f32.mrf.mxu0
        %v1349 = vadd.f32 %v1246, %v1348
        %v1350 = vpop.f32.mrf.mxu0
        %v1351 = vadd.f32 %v1248, %v1350
        %v1352 = vpop.f32.mrf.mxu0
        %v1353 = vadd.f32 %v1250, %v1352
        %1354 = vdwg.mxu0
        %v1355 = vmax.f32 %v1287, 0.0
        %v1356 = vmax.f32 %v1289, 0.0
        %v1357 = vmax.f32 %v1291, 0.0
        %v1358 = vmax.f32 %v1293, 0.0
        %v1359 = vmax.f32 %v1297, 0.0
        %v1360 = vmax.f32 %v1299, 0.0
        %v1361 = vmax.f32 %v1301, 0.0
        %v1362 = vmax.f32 %v1303, 0.0
        %v1363 = vmax.f32 %v1307, 0.0
        %v1364 = vmax.f32 %v1309, 0.0
        %v1365 = vmax.f32 %v1311, 0.0
        %v1366 = vmax.f32 %v1313, 0.0
        %v1367 = vmax.f32 %v1317, 0.0
        %v1368 = vmax.f32 %v1319, 0.0
        %v1369 = vmax.f32 %v1321, 0.0
        %v1370 = vmax.f32 %v1323, 0.0
        %v1371 = vmax.f32 %v1327, 0.0
        %v1372 = vmax.f32 %v1329, 0.0
        %v1373 = vmax.f32 %v1331, 0.0
        %v1374 = vmax.f32 %v1333, 0.0
        %v1375 = vmax.f32 %v1337, 0.0
        %v1376 = vmax.f32 %v1339, 0.0
        %v1377 = vmax.f32 %v1341, 0.0
        %v1378 = vmax.f32 %v1343, 0.0
        %v1379 = vmax.f32 %v1347, 0.0
        %v1380 = vmax.f32 %v1349, 0.0
        %v1381 = vmax.f32 %v1351, 0.0
        %v1382 = vmax.f32 %v1353, 0.0
        %v1383 = vpack.c.bf16 %v1357, %v1355
        %v1384 = vpack.c.bf16 %v1358, %v1356
        %v1385 = vpack.c.bf16 %v1361, %v1359
        %v1386 = vpack.c.bf16 %v1362, %v1360
        %v1387 = vpack.c.bf16 %v1365, %v1363
        %v1388 = vpack.c.bf16 %v1366, %v1364
        %v1389 = vpack.c.bf16 %v1369, %v1367
        %v1390 = vpack.c.bf16 %v1370, %v1368
        %v1391 = vpack.c.bf16 %v1373, %v1371
        %v1392 = vpack.c.bf16 %v1374, %v1372
        %v1393 = vpack.c.bf16 %v1377, %v1375
        %v1394 = vpack.c.bf16 %v1378, %v1376
        %v1395 = vpack.c.bf16 %v1381, %v1379
        %v1396 = vpack.c.bf16 %v1382, %v1380
        %v1397 = vld [vmem:[%s5] sm:$0xf]
        %v1398 = vld [vmem:[%s5 + $0x4] sm:$0xf]
        %v1399 = vld [vmem:[%s5 + $0x8] sm:$0xf]
        %v1400 = vld [vmem:[%s5 + $0xc] sm:$0xf]
        %v1401 = vld [vmem:[%s5 + $0x10] sm:$0xf]
        %v1402 = vld [vmem:[%s5 + $0x14] sm:$0xf]
        %v1403 = vld [vmem:[%s5 + $0x18] sm:$0xf]
        %v1404 = vld [vmem:[%s5 + $0x1c] sm:$0xf]
        %v1405 = vld [vmem:[%s5 + $0x20] sm:$0xf]
        %v1406 = vld [vmem:[%s5 + $0x24] sm:$0xf]
        %v1407 = vld [vmem:[%s5 + $0x28] sm:$0xf]
        %v1408 = vld [vmem:[%s5 + $0x2c] sm:$0xf]
        %v1409 = vld [vmem:[%s5 + $0x30] sm:$0xf]
        %v1410 = vld [vmem:[%s5 + $0x34] sm:$0xf]
        %v1411 = vld [vmem:[%s5 + $0x38] sm:$0xf]
        %v1412 = vld [vmem:[%s5 + $0x3c] sm:$0xf]
        %v1413 = vld [vmem:[%s5 + $0x40] sm:$0xf]
        %v1414 = vld [vmem:[%s5 + $0x44] sm:$0xf]
        %v1415 = vld [vmem:[%s5 + $0x48] sm:$0xf]
        %v1416 = vld [vmem:[%s5 + $0x4c] sm:$0xf]
        %v1417 = vld [vmem:[%s5 + $0x50] sm:$0xf]
        %v1418 = vld [vmem:[%s5 + $0x54] sm:$0xf]
        %v1419 = vld [vmem:[%s5 + $0x58] sm:$0xf]
        %v1420 = vld [vmem:[%s5 + $0x5c] sm:$0xf]
        %v1421 = vld [vmem:[%s5 + $0x60] sm:$0xf]
        %v1422 = vld [vmem:[%s5 + $0x64] sm:$0xf]
        %v1423 = vld [vmem:[%s5 + $0x68] sm:$0xf]
        %v1424 = vld [vmem:[%s5 + $0x6c] sm:$0xf]
        %v1425 = vld [vmem:[%s5 + $0x70] sm:$0xf]
        %v1426 = vld [vmem:[%s5 + $0x74] sm:$0xf]
        %v1427 = vld [vmem:[%s5 + $0x78] sm:$0xf]
        %v1428 = vld [vmem:[%s5 + $0x7c] sm:$0xf]
        %v1429 = vld [vmem:[%s6] sm:$0x1]
        %v1431 = vlaneseq
        %v1432 = vshrl.u32 %v1431, 7
        %v1433 = vsub.s32 0, %v1432
        %v1434 = vrot.slane %v1429, %v1433
        %v1468 = vunpack.c.l.b16 %v1397
        %v1469 = vunpack.c.l.b16 %v1398
        %v1470 = vunpack.c.l.b16 %v1399
        %v1471 = vunpack.c.l.b16 %v1400
        %v1472 = vunpack.c.l.b16 %v1401
        %v1473 = vunpack.c.l.b16 %v1402
        %v1474 = vunpack.c.l.b16 %v1403
        %v1475 = vunpack.c.l.b16 %v1404
        %v1476 = vunpack.c.l.b16 %v1405
        %v1477 = vunpack.c.l.b16 %v1406
        %v1478 = vunpack.c.l.b16 %v1407
        %v1479 = vunpack.c.l.b16 %v1408
        %v1480 = vunpack.c.l.b16 %v1409
        %v1481 = vunpack.c.l.b16 %v1410
        %v1482 = vunpack.c.l.b16 %v1411
        %v1483 = vunpack.c.l.b16 %v1412
        %v1484 = vunpack.c.l.b16 %v1413
        %v1485 = vunpack.c.l.b16 %v1414
        %v1486 = vunpack.c.l.b16 %v1415
        %v1487 = vunpack.c.l.b16 %v1416
        %v1488 = vunpack.c.l.b16 %v1417
        %v1489 = vunpack.c.l.b16 %v1418
        %v1490 = vunpack.c.l.b16 %v1419
        %v1491 = vunpack.c.l.b16 %v1420
        %v1492 = vunpack.c.l.b16 %v1421
        %v1493 = vunpack.c.l.b16 %v1422
        %v1494 = vunpack.c.l.b16 %v1423
        %v1495 = vunpack.c.l.b16 %v1424
        %v1496 = vunpack.c.l.b16 %v1425
        %v1497 = vunpack.c.l.b16 %v1426
        %v1498 = vunpack.c.l.b16 %v1427
        %v1499 = vunpack.c.l.b16 %v1428
        %v1500 = vpack.c.b16 %v1469, %v1468
        %v1501 = vpack.c.b16 %v1471, %v1470
        %v1502 = vpack.c.b16 %v1473, %v1472
        %v1503 = vpack.c.b16 %v1475, %v1474
        %v1504 = vpack.c.b16 %v1477, %v1476
        %v1505 = vpack.c.b16 %v1479, %v1478
        %v1506 = vpack.c.b16 %v1481, %v1480
        %v1507 = vpack.c.b16 %v1483, %v1482
        %v1508 = vpack.c.b16 %v1485, %v1484
        %v1509 = vpack.c.b16 %v1487, %v1486
        %v1510 = vpack.c.b16 %v1489, %v1488
        %v1511 = vpack.c.b16 %v1491, %v1490
        %v1512 = vpack.c.b16 %v1493, %v1492
        %v1513 = vpack.c.b16 %v1495, %v1494
        %v1514 = vpack.c.b16 %v1497, %v1496
        %v1515 = vpack.c.b16 %v1499, %v1498
        %1532 = vmatprep.subr.bf16.mxu0 0
        %1533 = vmatpush1.bf16.msra.mxu0 %v1507
        %1534 = vmatprep.subr.bf16.mxu0 0
        %1535 = vmatpush1.bf16.msra.mxu0 %v1506
        %1536 = vmatprep.subr.bf16.mxu0 0
        %1537 = vmatpush1.bf16.msra.mxu0 %v1505
        %1538 = vmatprep.subr.bf16.mxu0 0
        %1539 = vmatpush1.bf16.msra.mxu0 %v1504
        %1540 = vmatprep.subr.bf16.mxu0 0
        %1541 = vmatpush1.bf16.msra.mxu0 %v1503
        %1542 = vmatprep.subr.bf16.mxu0 0
        %1543 = vmatpush1.bf16.msra.mxu0 %v1502
        %1544 = vmatprep.subr.bf16.mxu0 0
        %1545 = vmatpush1.bf16.msra.mxu0 %v1501
        %1546 = vmatprep.subr.bf16.mxu0 0
        %1547 = vmatpush1.bf16.msra.mxu0 %v1500
        %1548 = vmatprep.subr.bf16.mxu0 0
        %1549 = vmatpush2.bf16.msra.mxu0 %v1515
        %1550 = vmatprep.subr.bf16.mxu0 0
        %1551 = vmatpush2.bf16.msra.mxu0 %v1514
        %1552 = vmatprep.subr.bf16.mxu0 0
        %1553 = vmatpush2.bf16.msra.mxu0 %v1513
        %1554 = vmatprep.subr.bf16.mxu0 0
        %1555 = vmatpush2.bf16.msra.mxu0 %v1512
        %1556 = vmatprep.subr.bf16.mxu0 0
        %1557 = vmatpush2.bf16.msra.mxu0 %v1511
        %1558 = vmatprep.subr.bf16.mxu0 0
        %1559 = vmatpush2.bf16.msra.mxu0 %v1510
        %1560 = vmatprep.subr.bf16.mxu0 0
        %1561 = vmatpush2.bf16.msra.mxu0 %v1509
        %1562 = vmatprep.subr.bf16.mxu0 0
        %1563 = vmatpush2.bf16.msra.mxu0 %v1508
        %1564 = vmatprep.mubr.bf16.mxu0 %v1384
        %1565 = vmatmul.mubr.bf16.gmra.mxu0 %v1383
        %v1566 = vpop.f32.mrf.mxu0
        %v1567 = vadd.f32 %v1434, %v1566
        %v1568 = vpop.f32.mrf.mxu0
        %v1569 = vpop.f32.mrf.mxu0
        %v1570 = vadd.f32 %v1434, %v1569
        %v1571 = vpop.f32.mrf.mxu0
        %1572 = vmatprep.mubr.bf16.mxu0 %v1386
        %1573 = vmatmul.mubr.bf16.gmra.mxu0 %v1385
        %v1574 = vpop.f32.mrf.mxu0
        %v1575 = vadd.f32 %v1434, %v1574
        %v1576 = vpop.f32.mrf.mxu0
        %v1577 = vpop.f32.mrf.mxu0
        %v1578 = vadd.f32 %v1434, %v1577
        %v1579 = vpop.f32.mrf.mxu0
        %1580 = vmatprep.mubr.bf16.mxu0 %v1388
        %1581 = vmatmul.mubr.bf16.gmra.mxu0 %v1387
        %v1582 = vpop.f32.mrf.mxu0
        %v1583 = vadd.f32 %v1434, %v1582
        %v1584 = vpop.f32.mrf.mxu0
        %v1585 = vpop.f32.mrf.mxu0
        %v1586 = vadd.f32 %v1434, %v1585
        %v1587 = vpop.f32.mrf.mxu0
        %1588 = vmatprep.mubr.bf16.mxu0 %v1390
        %1589 = vmatmul.mubr.bf16.gmra.mxu0 %v1389
        %v1590 = vpop.f32.mrf.mxu0
        %v1591 = vadd.f32 %v1434, %v1590
        %v1592 = vpop.f32.mrf.mxu0
        %v1593 = vpop.f32.mrf.mxu0
        %v1594 = vadd.f32 %v1434, %v1593
        %v1595 = vpop.f32.mrf.mxu0
        %1596 = vmatprep.mubr.bf16.mxu0 %v1392
        %1597 = vmatmul.mubr.bf16.gmra.mxu0 %v1391
        %v1598 = vpop.f32.mrf.mxu0
        %v1599 = vadd.f32 %v1434, %v1598
        %v1600 = vpop.f32.mrf.mxu0
        %v1601 = vpop.f32.mrf.mxu0
        %v1602 = vadd.f32 %v1434, %v1601
        %v1603 = vpop.f32.mrf.mxu0
        %1604 = vmatprep.mubr.bf16.mxu0 %v1394
        %1605 = vmatmul.mubr.bf16.gmra.mxu0 %v1393
        %v1606 = vpop.f32.mrf.mxu0
        %v1607 = vadd.f32 %v1434, %v1606
        %v1608 = vpop.f32.mrf.mxu0
        %v1609 = vpop.f32.mrf.mxu0
        %v1610 = vadd.f32 %v1434, %v1609
        %v1611 = vpop.f32.mrf.mxu0
        %1612 = vmatprep.mubr.bf16.mxu0 %v1396
        %1613 = vmatmul.mubr.bf16.gmra.mxu0 %v1395
        %v1614 = vpop.f32.mrf.mxu0
        %v1615 = vadd.f32 %v1434, %v1614
        %v1616 = vpop.f32.mrf.mxu0
        %v1617 = vpop.f32.mrf.mxu0
        %v1618 = vadd.f32 %v1434, %v1617
        %v1619 = vpop.f32.mrf.mxu0
        %1620 = vdwg.mxu0
        %v1621 = vmax.f32 %v1567, 0.0
        %v1622 = vmax.f32 %v1570, 0.0
        %v1623 = vmax.f32 %v1575, 0.0
        %v1624 = vmax.f32 %v1578, 0.0
        %v1625 = vmax.f32 %v1583, 0.0
        %v1626 = vmax.f32 %v1586, 0.0
        %v1627 = vmax.f32 %v1591, 0.0
        %v1628 = vmax.f32 %v1594, 0.0
        %v1629 = vmax.f32 %v1599, 0.0
        %v1630 = vmax.f32 %v1602, 0.0
        %v1631 = vmax.f32 %v1607, 0.0
        %v1632 = vmax.f32 %v1610, 0.0
        %v1633 = vmax.f32 %v1615, 0.0
        %v1634 = vmax.f32 %v1618, 0.0
        %v1635 = vpack.c.bf16 %v1622, %v1621
        %v1636 = vpack.c.bf16 %v1624, %v1623
        %v1637 = vpack.c.bf16 %v1626, %v1625
        %v1638 = vpack.c.bf16 %v1628, %v1627
        %v1639 = vpack.c.bf16 %v1630, %v1629
        %v1640 = vpack.c.bf16 %v1632, %v1631
        %v1641 = vpack.c.bf16 %v1634, %v1633
        %v1642 = vld [vmem:[%s7] sm:$0xf]
        %v1643 = vld [vmem:[%s7 + $0x4] sm:$0xf]
        %v1644 = vld [vmem:[%s7 + $0x8] sm:$0xf]
        %v1645 = vld [vmem:[%s7 + $0xc] sm:$0xf]
        %v1646 = vld [vmem:[%s7 + $0x10] sm:$0xf]
        %v1647 = vld [vmem:[%s7 + $0x14] sm:$0xf]
        %v1648 = vld [vmem:[%s7 + $0x18] sm:$0xf]
        %v1649 = vld [vmem:[%s7 + $0x1c] sm:$0xf]
        %v1650 = vld [vmem:[%s7 + $0x20] sm:$0xf]
        %v1651 = vld [vmem:[%s7 + $0x24] sm:$0xf]
        %v1652 = vld [vmem:[%s7 + $0x28] sm:$0xf]
        %v1653 = vld [vmem:[%s7 + $0x2c] sm:$0xf]
        %v1654 = vld [vmem:[%s7 + $0x30] sm:$0xf]
        %v1655 = vld [vmem:[%s7 + $0x34] sm:$0xf]
        %v1656 = vld [vmem:[%s7 + $0x38] sm:$0xf]
        %v1657 = vld [vmem:[%s7 + $0x3c] sm:$0xf]
        %v1658 = vld [vmem:[%s8] sm:$0x1]
        %v1660 = vlaneseq
        %v1661 = vshrl.u32 %v1660, 7
        %v1662 = vsub.s32 0, %v1661
        %v1663 = vrot.slane %v1658, %v1662
        %v1681 = vunpack.c.l.b16 %v1642
        %v1682 = vunpack.c.l.b16 %v1643
        %v1683 = vunpack.c.l.b16 %v1644
        %v1684 = vunpack.c.l.b16 %v1645
        %v1685 = vunpack.c.l.b16 %v1646
        %v1686 = vunpack.c.l.b16 %v1647
        %v1687 = vunpack.c.l.b16 %v1648
        %v1688 = vunpack.c.l.b16 %v1649
        %v1689 = vunpack.c.l.b16 %v1650
        %v1690 = vunpack.c.l.b16 %v1651
        %v1691 = vunpack.c.l.b16 %v1652
        %v1692 = vunpack.c.l.b16 %v1653
        %v1693 = vunpack.c.l.b16 %v1654
        %v1694 = vunpack.c.l.b16 %v1655
        %v1695 = vunpack.c.l.b16 %v1656
        %v1696 = vunpack.c.l.b16 %v1657
        %v1697 = vpack.c.b16 %v1682, %v1681
        %v1698 = vpack.c.b16 %v1684, %v1683
        %v1699 = vpack.c.b16 %v1686, %v1685
        %v1700 = vpack.c.b16 %v1688, %v1687
        %v1701 = vpack.c.b16 %v1690, %v1689
        %v1702 = vpack.c.b16 %v1692, %v1691
        %v1703 = vpack.c.b16 %v1694, %v1693
        %v1704 = vpack.c.b16 %v1696, %v1695
        %1713 = vmatprep.subr.bf16.mxu0 0
        %1714 = vmatpush1.bf16.msra.mxu0 %v1704
        %1715 = vmatprep.subr.bf16.mxu0 0
        %1716 = vmatpush1.bf16.msra.mxu0 %v1703
        %1717 = vmatprep.subr.bf16.mxu0 0
        %1718 = vmatpush1.bf16.msra.mxu0 %v1702
        %1719 = vmatprep.subr.bf16.mxu0 0
        %1720 = vmatpush1.bf16.msra.mxu0 %v1701
        %1721 = vmatprep.subr.bf16.mxu0 0
        %1722 = vmatpush1.bf16.msra.mxu0 %v1700
        %1723 = vmatprep.subr.bf16.mxu0 0
        %1724 = vmatpush1.bf16.msra.mxu0 %v1699
        %1725 = vmatprep.subr.bf16.mxu0 0
        %1726 = vmatpush1.bf16.msra.mxu0 %v1698
        %1727 = vmatprep.subr.bf16.mxu0 0
        %1728 = vmatpush1.bf16.msra.mxu0 %v1697
        %1729 = vmatprep.subr.bf16.mxu0 0
        %1730 = vmatpush2.bf16.msra.mxu0 0
        %1731 = vmatprep.subr.bf16.mxu0 0
        %1732 = vmatpush2.bf16.msra.mxu0 0
        %1733 = vmatprep.subr.bf16.mxu0 0
        %1734 = vmatpush2.bf16.msra.mxu0 0
        %1735 = vmatprep.subr.bf16.mxu0 0
        %1736 = vmatpush2.bf16.msra.mxu0 0
        %1737 = vmatprep.subr.bf16.mxu0 0
        %1738 = vmatpush2.bf16.msra.mxu0 0
        %1739 = vmatprep.subr.bf16.mxu0 0
        %1740 = vmatpush2.bf16.msra.mxu0 0
        %1741 = vmatprep.subr.bf16.mxu0 0
        %1742 = vmatpush2.bf16.msra.mxu0 0
        %1743 = vmatprep.subr.bf16.mxu0 0
        %1744 = vmatpush2.bf16.msra.mxu0 0
        %1745 = vmatprep.mubr.bf16.mxu0 0
        %1746 = vmatmul.mubr.bf16.gmra.mxu0 %v1635
        %v1747 = vpop.f32.mrf.mxu0
        %v1748 = vadd.f32 %v1663, %v1747
        %v1749 = vpop.f32.mrf.mxu0
        %v1750 = vpop.f32.mrf.mxu0
        %v1751 = vadd.f32 %v1663, %v1750
        %v1752 = vpop.f32.mrf.mxu0
        %1753 = vmatprep.mubr.bf16.mxu0 0
        %1754 = vmatmul.mubr.bf16.gmra.mxu0 %v1636
        %v1755 = vpop.f32.mrf.mxu0
        %v1756 = vadd.f32 %v1663, %v1755
        %v1757 = vpop.f32.mrf.mxu0
        %v1758 = vpop.f32.mrf.mxu0
        %v1759 = vadd.f32 %v1663, %v1758
        %v1760 = vpop.f32.mrf.mxu0
        %1761 = vmatprep.mubr.bf16.mxu0 0
        %1762 = vmatmul.mubr.bf16.gmra.mxu0 %v1637
        %v1763 = vpop.f32.mrf.mxu0
        %v1764 = vadd.f32 %v1663, %v1763
        %v1765 = vpop.f32.mrf.mxu0
        %v1766 = vpop.f32.mrf.mxu0
        %v1767 = vadd.f32 %v1663, %v1766
        %v1768 = vpop.f32.mrf.mxu0
        %1769 = vmatprep.mubr.bf16.mxu0 0
        %1770 = vmatmul.mubr.bf16.gmra.mxu0 %v1638
        %v1771 = vpop.f32.mrf.mxu0
        %v1772 = vadd.f32 %v1663, %v1771
        %v1773 = vpop.f32.mrf.mxu0
        %v1774 = vpop.f32.mrf.mxu0
        %v1775 = vadd.f32 %v1663, %v1774
        %v1776 = vpop.f32.mrf.mxu0
        %1777 = vmatprep.mubr.bf16.mxu0 0
        %1778 = vmatmul.mubr.bf16.gmra.mxu0 %v1639
        %v1779 = vpop.f32.mrf.mxu0
        %v1780 = vadd.f32 %v1663, %v1779
        %v1781 = vpop.f32.mrf.mxu0
        %v1782 = vpop.f32.mrf.mxu0
        %v1783 = vadd.f32 %v1663, %v1782
        %v1784 = vpop.f32.mrf.mxu0
        %1785 = vmatprep.mubr.bf16.mxu0 0
        %1786 = vmatmul.mubr.bf16.gmra.mxu0 %v1640
        %v1787 = vpop.f32.mrf.mxu0
        %v1788 = vadd.f32 %v1663, %v1787
        %v1789 = vpop.f32.mrf.mxu0
        %v1790 = vpop.f32.mrf.mxu0
        %v1791 = vadd.f32 %v1663, %v1790
        %v1792 = vpop.f32.mrf.mxu0
        %1793 = vmatprep.mubr.bf16.mxu0 0
        %1794 = vmatmul.mubr.bf16.gmra.mxu0 %v1641
        %v1795 = vpop.f32.mrf.mxu0
        %v1796 = vadd.f32 %v1663, %v1795
        %v1797 = vpop.f32.mrf.mxu0
        %v1798 = vpop.f32.mrf.mxu0
        %v1799 = vadd.f32 %v1663, %v1798
        %v1800 = vpop.f32.mrf.mxu0
        %1801 = vdwg.mxu0
        %1802 = vst [vmem:[%s341] sm:$0xff] %v1748
        %1803 = vst [vmem:[%s341 + $0x8] sm:$0xff] %v1751
        %1804 = vst [vmem:[%s341 + $0x10] sm:$0xff] %v1756
        %1805 = vst [vmem:[%s341 + $0x18] sm:$0xff] %v1759
        %1806 = vst [vmem:[%s341 + $0x20] sm:$0xff] %v1764
        %1807 = vst [vmem:[%s341 + $0x28] sm:$0xff] %v1767
        %1808 = vst [vmem:[%s341 + $0x30] sm:$0xff] %v1772
        %1809 = vst [vmem:[%s341 + $0x38] sm:$0xff] %v1775
        %1810 = vst [vmem:[%s341 + $0x40] sm:$0xff] %v1780
        %1811 = vst [vmem:[%s341 + $0x48] sm:$0xff] %v1783
        %1812 = vst [vmem:[%s341 + $0x50] sm:$0xff] %v1788
        %1813 = vst [vmem:[%s341 + $0x58] sm:$0xff] %v1791
        %1814 = vst [vmem:[%s341 + $0x60] sm:$0xff] %v1796
        %1815 = vst [vmem:[%s341 + $0x68] sm:$0xff] %v1799
        %s1816 = sand.u32 %s226, 1
        %s1817 = scalar_lea.sflag [#allocation4], %s1816
        %s1818 = sand.u32 %s226, 1
        %s1819 = smul.addr %s1818, 112
        %s1820 = scalar_lea.vmem [#allocation5], %s1819
        // Predicated region
        $region61: #{tpu_custom_call.1} parent=55 // pred_check
          %p1821 = pneg %p236
        $region62: #{tpu_custom_call.1} parent=55 // pred_check_branch
          %1823 = sbr.rel (%p1821) target = $region64
        $region63: #{tpu_custom_call.1} parent=55 // pred_region
          %s1824 = smul.u32 14, %s24
          %s1826 = ssub.s32 1792, 1792
          %1827 = vsyncadd %s1817, %s1826
          %s1828 = smul.addr %s1824, 128
          %s1829 = scalar_lea.hbm %s9, %s1828
          %s1830 = sshll.u32 %s1820, 4
          %s1831 = int_to_ptr.vmem [resolvable:$true] %s1830
          %1836 = dma.vmem_to_hbm [thread:$0]  %s1831, 1792, %s1829, %s1817, 128, 128, 8
        $region64: #{tpu_custom_call.1} parent=55 // pred_fallthru
          _
      $region56: #{tpu_custom_call.1} parent=5 // pred_fallthru
        _
      %p1837 = scmp.le.s32.totalorder 2, %s19
      // Predicated region
      $region65: #{tpu_custom_call.1} parent=5 // pred_check
        %p1838 = pneg %p1837
      $region66: #{tpu_custom_call.1} parent=5 // pred_check_branch
        %1840 = sbr.rel (%p1838) target = $region68
      $region67: #{tpu_custom_call.1} parent=5 // pred_region
        %s1841 = ssub.s32 %s19, 2
        // Predicated region
        $region69: #{tpu_custom_call.1} parent=67 // pred_check
          %p1842 = pneg %p242
        $region70: #{tpu_custom_call.1} parent=67 // pred_check_branch
          %1844 = sbr.rel (%p1842) target = $region72
        $region71: #{tpu_custom_call.1} parent=67 // pred_region
          %s1845 = sand.u32 %s227, 1
          %s1846 = scalar_lea.sflag [#allocation4], %s1845
          %s1847 = sand.u32 %s227, 1
          %s1848 = smul.addr %s1847, 112
          %s1849 = scalar_lea.vmem [#allocation5], %s1848
          %1850 = dma.done %s1846, 1792
        $region72: #{tpu_custom_call.1} parent=67 // pred_fallthru
          _
      $region68: #{tpu_custom_call.1} parent=5 // pred_fallthru
        _
    $region6: #{tpu_custom_call.1} parent=1 // loop_footer
      %s23 = sadd.s32 1, %s19
    $region7: #{tpu_custom_call.1} parent=1 // loop_footer_branch
      %18 = sbr.rel target = $region3
    $region8: #{tpu_custom_call.1} parent=1 // loop_exit
      _
    %1851 = vsyncpa [#allocation3], 1
    %s1852 = scalar_lea.sflag [#allocation3], 1
    %1853 = vsyncpa %s1852, 1
    %1854 = vsyncpa [#allocation4], 1
    %s1855 = scalar_lea.sflag [#allocation4], 1
    %1856 = vsyncpa %s1855, 1

</llo_original>
